<compile_context>
chip_gen: v7x
topology: tpu7x:2x2x1
jax: 0.10.0
libtpu: 0.0.40
codegen_flags: <defaults>
</compile_context>

<pallas_src>
import math
import functools

import jax
import jax.numpy as jnp
from jax.experimental import pallas as pl
from jax.experimental.pallas import tpu as pltpu


def fused_dense_gcn_kernel(nlayers, fin, hidden, out_dim, use_bf16,
                           x_ref, adj_ref, w_ref, wself_ref, b_ref, o_ref):
    """All GCN layers + dense concat in one kernel (everything VMEM-resident).

    x_ref:     (N, fin)            f32
    adj_ref:   (N, N)              f32 or bf16 (pre-cast host-side)
    w_ref:     (L, Fmax, H)        BN-scale-folded W,      zero row-padded
    wself_ref: (L, Fmax, H)        BN-scale-folded W_self, zero row-padded
    b_ref:     (L, 1, H)           bias*scale + shift (f32)
    o_ref:     (N, out_pad)        out_pad = round_up(fin + L*H, 128)
    """
    cdt = jnp.bfloat16 if use_bf16 else jnp.float32
    x = x_ref[...]                           # (N, fin) f32

    # Store the "input" segment immediately (no dense_list bookkeeping).
    o_ref[:, hidden:hidden + fin] = x

    # Zero the lane-padding tail once so the padded output is deterministic
    # and the single HBM writeback stays lane-dense / unmasked.
    out_pad = o_ref.shape[1]
    if out_pad > out_dim:
        o_ref[:, out_dim:out_pad] = jnp.zeros(
            (o_ref.shape[0], out_pad - out_dim), o_ref.dtype)

    adj = adj_ref[...]                       # loaded once, reused every layer
    h = x                                    # running node features (f32)

    for i in range(nlayers):
        fin_i = fin if i == 0 else hidden    # static per layer
        w = w_ref[i][:fin_i, :]              # (fin_i, H)
        ws = wself_ref[i][:fin_i, :]         # (fin_i, H)
        b = b_ref[i]                         # (1, H)

        hc = h.astype(cdt) if use_bf16 else h
        if fin_i <= hidden:
            # Aggregate first: N^2 MXU term scales with fin_i (<= H).
            t = jnp.dot(adj, hc, preferred_element_type=jnp.float32)
            tc = t.astype(cdt) if use_bf16 else t
            acc = (jnp.dot(tc, w, preferred_element_type=jnp.float32)
                   + jnp.dot(hc, ws, preferred_element_type=jnp.float32))
        else:
            # Project first: N^2 MXU term scales with H (< fin_i).
            p = jnp.dot(hc, w, preferred_element_type=jnp.float32)
            pc = p.astype(cdt) if use_bf16 else p
            acc = (jnp.dot(adj, pc, preferred_element_type=jnp.float32)
                   + jnp.dot(hc, ws, preferred_element_type=jnp.float32))

        # Folded bias/BN epilogue + ReLU (eval-mode dropout is identity).
        h = jnp.maximum(acc + b, 0.0)

        # Store each segment as soon as it is produced (static column slices).
        if i < nlayers - 1:
            col = hidden + fin + i * hidden
            o_ref[:, col:col + hidden] = h
        else:
            o_ref[:, 0:hidden] = h           # final layer goes first in concat


def dense_gcn_block(x, adj, params, *, use_bf16=True):
    """DenseGCNBlock.forward (eval mode), fused into one pallas_call."""
    N, fin = x.shape
    hidden = params[0]["w"].shape[1]
    nlayers = len(params)
    fmax = max(fin, hidden)
    out_dim = fin + hidden * nlayers
    out_pad = ((out_dim + 127) // 128) * 128          # lane-dense output

    wdt = jnp.bfloat16 if use_bf16 else jnp.float32

    # Host-side folding of eval-BN + bias into the weights, packed into three
    # stacked arrays (fewer DMA descriptors than 2L separate tiny inputs).
    w_all = jnp.zeros((nlayers, fmax, hidden), jnp.float32)
    ws_all = jnp.zeros((nlayers, fmax, hidden), jnp.float32)
    b_all = jnp.zeros((nlayers, 1, hidden), jnp.float32)
    for i, p in enumerate(params):
        scale = p["bn_scale"]
        fin_i = p["w"].shape[0]
        w_all = w_all.at[i, :fin_i, :].set(p["w"] * scale[None, :])
        ws_all = ws_all.at[i, :fin_i, :].set(p["w_self"] * scale[None, :])
        b_all = b_all.at[i, 0, :].set(p["bias"] * scale + p["bn_shift"])
    w_all = w_all.astype(wdt)
    ws_all = ws_all.astype(wdt)
    adj_in = adj.astype(wdt)

    # VMEM limit derived from the actual footprint (with headroom), instead of
    # a hard-coded 48 MiB.
    footprint = (x.size * x.dtype.itemsize
                 + adj_in.size * adj_in.dtype.itemsize
                 + w_all.size * w_all.dtype.itemsize
                 + ws_all.size * ws_all.dtype.itemsize
                 + b_all.size * b_all.dtype.itemsize
                 + N * out_pad * 4)
    vmem_limit = int(min(max(2 * footprint + (4 << 20), 16 << 20), 112 << 20))

    vmem = pl.BlockSpec(memory_space=pltpu.MemorySpace.VMEM)
    kernel = functools.partial(fused_dense_gcn_kernel, nlayers, fin, hidden,
                               out_dim, use_bf16)

    out_padded = pl.pallas_call(
        kernel,
        out_shape=jax.ShapeDtypeStruct((N, out_pad), jnp.float32),
        in_specs=[vmem] * 5,
        out_specs=vmem,
        compiler_params=pltpu.CompilerParams(vmem_limit_bytes=vmem_limit),
    )(x, adj_in, w_all, ws_all, b_all)

    # Compact packed view (drop the lane padding).
    return out_padded[:, :out_dim]


def glorot_init(key, fan_in, fan_out):
    stdv = math.sqrt(6.0 / (fan_in + fan_out))
    return jax.random.uniform(key, (fan_in, fan_out), jnp.float32,
                              minval=-stdv, maxval=stdv)


def make_params(key, in_features, hidden, nbaselayer):
    """Deterministic parameter init (glorot weights, zero bias, synthetic BN)."""
    params = []
    eps = 1e-5
    for i in range(nbaselayer):
        fin = in_features if i == 0 else hidden
        fout = hidden
        key, k1, k2, k3, k4 = jax.random.split(key, 5)
        w = glorot_init(k1, fin, fout)
        w_self = glorot_init(k2, fin, fout)
        bias = jnp.zeros((fout,), jnp.float32)
        # BatchNorm1d running stats + affine params (deterministic, non-trivial)
        gamma = 1.0 + 0.1 * jax.random.normal(k3, (fout,), jnp.float32)
        beta = 0.05 * jax.random.normal(k4, (fout,), jnp.float32)
        running_mean = jnp.zeros((fout,), jnp.float32)
        running_var = jnp.ones((fout,), jnp.float32)
        scale = gamma / jnp.sqrt(running_var + eps)
        shift = beta - running_mean * scale
        params.append(dict(w=w, w_self=w_self, bias=bias,
                           bn_scale=scale, bn_shift=shift))
    return params


def dense_gcn_block_ref(x, adj, params):
    """Pure-JAX f32 reference (unfused, unfolded) for correctness check."""
    dense_list = []
    h = x
    for p in params:
        dense_list.append(h)
        out = adj @ (h @ p["w"]) + h @ p["w_self"] + p["bias"]
        out = out * p["bn_scale"] + p["bn_shift"]
        h = jnp.maximum(out, 0.0)
    return jnp.concatenate([h] + dense_list, axis=1)


if __name__ == "__main__":
    key = jax.random.PRNGKey(0)
    N = 64            # number of graph nodes
    in_features = 16
    hidden = 32
    nbaselayer = 3

    key, kx, ka, kp = jax.random.split(key, 4)
    x = jax.random.normal(kx, (N, in_features), jnp.float32)

    # symmetric, row-normalized-ish adjacency with self loops
    a = jax.random.uniform(ka, (N, N), jnp.float32)
    a = (a + a.T) * 0.5
    a = jnp.where(a > 0.8, a, 0.0) + jnp.eye(N, dtype=jnp.float32)
    a = a / jnp.sum(a, axis=1, keepdims=True)

    params = make_params(kp, in_features, hidden, nbaselayer)
    expected_dim = in_features + hidden * nbaselayer

    ref = dense_gcn_block_ref(x, a, params)

    # f32 MXU path: tight correctness check.
    out32 = jax.block_until_ready(dense_gcn_block(x, a, params, use_bf16=False))
    assert out32.shape == (N, expected_dim), out32.shape
    assert jnp.allclose(out32, ref, atol=1e-4, rtol=1e-4), \
        float(jnp.max(jnp.abs(out32 - ref)))

    # bf16 MXU-input path (native v6e/v7x throughput): relaxed tolerance
    # (bf16 rounding of adj/W/h vs the f32 reference).
    out16 = jax.block_until_ready(dense_gcn_block(x, a, params, use_bf16=True))
    assert out16.shape == (N, expected_dim), out16.shape
    assert jnp.allclose(out16, ref, atol=1e-1, rtol=1e-1), \
        float(jnp.max(jnp.abs(out16 - ref)))

    print("KERNEL_OK")
</pallas_src>

<mosaic_0001>
module attributes {stable_mosaic.version = 11 : i64} {
  func.func @fused_dense_gcn_kernel(%arg0: memref<64x16xf32, #tpu.memory_space<vmem>>, %arg1: memref<64x64xf32, #tpu.memory_space<vmem>>, %arg2: memref<3x32x32xf32, #tpu.memory_space<vmem>>, %arg3: memref<3x32x32xf32, #tpu.memory_space<vmem>>, %arg4: memref<3x1x32xf32, #tpu.memory_space<vmem>>, %arg5: memref<64x128xf32, #tpu.memory_space<vmem>>) attributes {dimension_semantics = [], scalar_prefetch = 0 : i64, scratch_operands = 0 : i64, tpu.core_type = #tpu.core_type<tc>} {
    %c0 = arith.constant 0 : index
    %c0_0 = arith.constant 0 : index
    %0 = vector.load %arg0[%c0, %c0_0] : memref<64x16xf32, #tpu.memory_space<vmem>>, vector<64x16xf32>
    %c0_1 = arith.constant 0 : index
    %c32 = arith.constant 32 : index
    %1 = vector.load %arg5[%c0_1, %c32] : memref<64x128xf32, #tpu.memory_space<vmem>>, vector<64x16xf32>
    tpu.vector_store %arg5[%c0_1, %c32], %0 {strides = array<i32>} : memref<64x128xf32, #tpu.memory_space<vmem>>, vector<64x16xf32>,
    %cst = arith.constant 0.000000e+00 : f32
    %2 = vector.broadcast %cst : f32 to vector<64x16xf32>
    %c0_2 = arith.constant 0 : index
    %c112 = arith.constant 112 : index
    %3 = vector.load %arg5[%c0_2, %c112] : memref<64x128xf32, #tpu.memory_space<vmem>>, vector<64x16xf32>
    tpu.vector_store %arg5[%c0_2, %c112], %2 {strides = array<i32>} : memref<64x128xf32, #tpu.memory_space<vmem>>, vector<64x16xf32>,
    %c0_3 = arith.constant 0 : index
    %c0_4 = arith.constant 0 : index
    %4 = vector.load %arg1[%c0_3, %c0_4] : memref<64x64xf32, #tpu.memory_space<vmem>>, vector<64x64xf32>
    %c0_5 = arith.constant 0 : index
    %c0_6 = arith.constant 0 : index
    %c0_7 = arith.constant 0 : index
    %5 = vector.load %arg2[%c0_5, %c0_6, %c0_7] : memref<3x32x32xf32, #tpu.memory_space<vmem>>, vector<1x32x32xf32>
    %6 = vector.shape_cast %5 : vector<1x32x32xf32> to vector<32x32xf32>
    %7 = vector.extract_strided_slice %6 {offsets = [0, 0], sizes = [16, 32], strides = [1, 1]} : vector<32x32xf32> to vector<16x32xf32>
    %c0_8 = arith.constant 0 : index
    %c0_9 = arith.constant 0 : index
    %c0_10 = arith.constant 0 : index
    %8 = vector.load %arg3[%c0_8, %c0_9, %c0_10] : memref<3x32x32xf32, #tpu.memory_space<vmem>>, vector<1x32x32xf32>
    %9 = vector.shape_cast %8 : vector<1x32x32xf32> to vector<32x32xf32>
    %10 = vector.extract_strided_slice %9 {offsets = [0, 0], sizes = [16, 32], strides = [1, 1]} : vector<32x32xf32> to vector<16x32xf32>
    %c0_11 = arith.constant 0 : index
    %c0_12 = arith.constant 0 : index
    %c0_13 = arith.constant 0 : index
    %11 = vector.load %arg4[%c0_11, %c0_12, %c0_13] : memref<3x1x32xf32, #tpu.memory_space<vmem>>, vector<1x1x32xf32>
    %12 = vector.shape_cast %11 : vector<1x1x32xf32> to vector<1x32xf32>
    %cst_14 = arith.constant dense<0.000000e+00> : vector<64x16xf32>
    %13 = tpu.matmul %4, %0, %cst_14 {dimension_numbers = #tpu.dot_dimension_numbers<[1], [0], [0], [1], [0, 0, 1, 1], [], []>} : vector<64x64xf32>, vector<64x16xf32>, vector<64x16xf32> -> vector<64x16xf32>
    %cst_15 = arith.constant dense<0.000000e+00> : vector<64x32xf32>
    %14 = tpu.matmul %13, %7, %cst_15 {dimension_numbers = #tpu.dot_dimension_numbers<[1], [0], [0], [1], [0, 0, 1, 1], [], []>} : vector<64x16xf32>, vector<16x32xf32>, vector<64x32xf32> -> vector<64x32xf32>
    %cst_16 = arith.constant dense<0.000000e+00> : vector<64x32xf32>
    %15 = tpu.matmul %0, %10, %cst_16 {dimension_numbers = #tpu.dot_dimension_numbers<[1], [0], [0], [1], [0, 0, 1, 1], [], []>} : vector<64x16xf32>, vector<16x32xf32>, vector<64x32xf32> -> vector<64x32xf32>
    %16 = arith.addf %14, %15 : vector<64x32xf32>
    %17 = vector.broadcast %12 : vector<1x32xf32> to vector<64x32xf32>
    %18 = arith.addf %16, %17 : vector<64x32xf32>
    %cst_17 = arith.constant 0.000000e+00 : f32
    %19 = vector.broadcast %cst_17 : f32 to vector<64x32xf32>
    %20 = arith.maximumf %18, %19 : vector<64x32xf32>
    %c0_18 = arith.constant 0 : index
    %c48 = arith.constant 48 : index
    %21 = vector.load %arg5[%c0_18, %c48] : memref<64x128xf32, #tpu.memory_space<vmem>>, vector<64x32xf32>
    tpu.vector_store %arg5[%c0_18, %c48], %20 {strides = array<i32>} : memref<64x128xf32, #tpu.memory_space<vmem>>, vector<64x32xf32>,
    %c1 = arith.constant 1 : index
    %c0_19 = arith.constant 0 : index
    %c0_20 = arith.constant 0 : index
    %22 = vector.load %arg2[%c1, %c0_19, %c0_20] : memref<3x32x32xf32, #tpu.memory_space<vmem>>, vector<1x32x32xf32>
    %23 = vector.shape_cast %22 : vector<1x32x32xf32> to vector<32x32xf32>
    %c1_21 = arith.constant 1 : index
    %c0_22 = arith.constant 0 : index
    %c0_23 = arith.constant 0 : index
    %24 = vector.load %arg3[%c1_21, %c0_22, %c0_23] : memref<3x32x32xf32, #tpu.memory_space<vmem>>, vector<1x32x32xf32>
    %25 = vector.shape_cast %24 : vector<1x32x32xf32> to vector<32x32xf32>
    %c1_24 = arith.constant 1 : index
    %c0_25 = arith.constant 0 : index
    %c0_26 = arith.constant 0 : index
    %26 = vector.load %arg4[%c1_24, %c0_25, %c0_26] : memref<3x1x32xf32, #tpu.memory_space<vmem>>, vector<1x1x32xf32>
    %27 = vector.shape_cast %26 : vector<1x1x32xf32> to vector<1x32xf32>
    %cst_27 = arith.constant dense<0.000000e+00> : vector<64x32xf32>
    %28 = tpu.matmul %4, %20, %cst_27 {dimension_numbers = #tpu.dot_dimension_numbers<[1], [0], [0], [1], [0, 0, 1, 1], [], []>} : vector<64x64xf32>, vector<64x32xf32>, vector<64x32xf32> -> vector<64x32xf32>
    %cst_28 = arith.constant dense<0.000000e+00> : vector<64x32xf32>
    %29 = tpu.matmul %28, %23, %cst_28 {dimension_numbers = #tpu.dot_dimension_numbers<[1], [0], [0], [1], [0, 0, 1, 1], [], []>} : vector<64x32xf32>, vector<32x32xf32>, vector<64x32xf32> -> vector<64x32xf32>
    %cst_29 = arith.constant dense<0.000000e+00> : vector<64x32xf32>
    %30 = tpu.matmul %20, %25, %cst_29 {dimension_numbers = #tpu.dot_dimension_numbers<[1], [0], [0], [1], [0, 0, 1, 1], [], []>} : vector<64x32xf32>, vector<32x32xf32>, vector<64x32xf32> -> vector<64x32xf32>
    %31 = arith.addf %29, %30 : vector<64x32xf32>
    %32 = vector.broadcast %27 : vector<1x32xf32> to vector<64x32xf32>
    %33 = arith.addf %31, %32 : vector<64x32xf32>
    %cst_30 = arith.constant 0.000000e+00 : f32
    %34 = vector.broadcast %cst_30 : f32 to vector<64x32xf32>
    %35 = arith.maximumf %33, %34 : vector<64x32xf32>
    %c0_31 = arith.constant 0 : index
    %c80 = arith.constant 80 : index
    %36 = vector.load %arg5[%c0_31, %c80] : memref<64x128xf32, #tpu.memory_space<vmem>>, vector<64x32xf32>
    tpu.vector_store %arg5[%c0_31, %c80], %35 {strides = array<i32>} : memref<64x128xf32, #tpu.memory_space<vmem>>, vector<64x32xf32>,
    %c2 = arith.constant 2 : index
    %c0_32 = arith.constant 0 : index
    %c0_33 = arith.constant 0 : index
    %37 = vector.load %arg2[%c2, %c0_32, %c0_33] : memref<3x32x32xf32, #tpu.memory_space<vmem>>, vector<1x32x32xf32>
    %38 = vector.shape_cast %37 : vector<1x32x32xf32> to vector<32x32xf32>
    %c2_34 = arith.constant 2 : index
    %c0_35 = arith.constant 0 : index
    %c0_36 = arith.constant 0 : index
    %39 = vector.load %arg3[%c2_34, %c0_35, %c0_36] : memref<3x32x32xf32, #tpu.memory_space<vmem>>, vector<1x32x32xf32>
    %40 = vector.shape_cast %39 : vector<1x32x32xf32> to vector<32x32xf32>
    %c2_37 = arith.constant 2 : index
    %c0_38 = arith.constant 0 : index
    %c0_39 = arith.constant 0 : index
    %41 = vector.load %arg4[%c2_37, %c0_38, %c0_39] : memref<3x1x32xf32, #tpu.memory_space<vmem>>, vector<1x1x32xf32>
    %42 = vector.shape_cast %41 : vector<1x1x32xf32> to vector<1x32xf32>
    %cst_40 = arith.constant dense<0.000000e+00> : vector<64x32xf32>
    %43 = tpu.matmul %4, %35, %cst_40 {dimension_numbers = #tpu.dot_dimension_numbers<[1], [0], [0], [1], [0, 0, 1, 1], [], []>} : vector<64x64xf32>, vector<64x32xf32>, vector<64x32xf32> -> vector<64x32xf32>
    %cst_41 = arith.constant dense<0.000000e+00> : vector<64x32xf32>
    %44 = tpu.matmul %43, %38, %cst_41 {dimension_numbers = #tpu.dot_dimension_numbers<[1], [0], [0], [1], [0, 0, 1, 1], [], []>} : vector<64x32xf32>, vector<32x32xf32>, vector<64x32xf32> -> vector<64x32xf32>
    %cst_42 = arith.constant dense<0.000000e+00> : vector<64x32xf32>
    %45 = tpu.matmul %35, %40, %cst_42 {dimension_numbers = #tpu.dot_dimension_numbers<[1], [0], [0], [1], [0, 0, 1, 1], [], []>} : vector<64x32xf32>, vector<32x32xf32>, vector<64x32xf32> -> vector<64x32xf32>
    %46 = arith.addf %44, %45 : vector<64x32xf32>
    %47 = vector.broadcast %42 : vector<1x32xf32> to vector<64x32xf32>
    %48 = arith.addf %46, %47 : vector<64x32xf32>
    %cst_43 = arith.constant 0.000000e+00 : f32
    %49 = vector.broadcast %cst_43 : f32 to vector<64x32xf32>
    %50 = arith.maximumf %48, %49 : vector<64x32xf32>
    %c0_44 = arith.constant 0 : index
    %c0_45 = arith.constant 0 : index
    %51 = vector.load %arg5[%c0_44, %c0_45] : memref<64x128xf32, #tpu.memory_space<vmem>>, vector<64x32xf32>
    tpu.vector_store %arg5[%c0_44, %c0_45], %50 {strides = array<i32>} : memref<64x128xf32, #tpu.memory_space<vmem>>, vector<64x32xf32>,
    return
  }
}

</mosaic_0001>

<llo_original>
// kernel: tpu_custom_call.1
$region0: #{tpu_custom_call.1}
  #allocation0 [shape = 'u32[]', space=smem, size = 0x4, offset = 0x4, fixed_abs, tag = 'smem constant byte address 0x4 - core index']
  #allocation1 [shape = 'u32[144,128]{1,0:T(1,128)}', space=vmem, size = 0x12000, scoped, tag = 'internal scratch']
  %s0 = inlined_call_operand.vmem [shape: f32[64,16], index: 0, kind: input, shape index: {}]
  %s1 = inlined_call_operand.vmem [shape: f32[64,64], index: 1, kind: input, shape index: {}]
  %s2 = inlined_call_operand.hbm [shape: f32[3,32,32], index: 2, kind: input, shape index: {}]
  %s3 = inlined_call_operand.hbm [shape: f32[3,32,32], index: 3, kind: input, shape index: {}]
  %s4 = inlined_call_operand.vmem [shape: f32[3,1,32], index: 4, kind: input, shape index: {}]
  %s5 = inlined_call_operand.hbm [shape: f32[64,128], index: 5, kind: output, shape index: {}]
  %s6 = sld [smem:[#allocation0]]
  $region38: #{tpu_custom_call.1} parent=0
    _
  %s8 = ssub.s32 1, %s6
  %s9 = scalar_select 0, %s8, %s6
  $region1: #{tpu_custom_call.1} parent=0
    #allocation2 [shape = 'u8[49152]{0}', space=vmem, size = 0xc000, scoped, tag = 'input window, operand 2, single buffered']
    #allocation3 [shape = 's32[1]{0}', space=sflag, size = 0x4, scoped, tag = 'scoped memory for tpu_custom_call.1']
    #allocation4 [shape = 's32[1]{0}', space=sflag, size = 0x4, scoped, tag = 'scoped memory for tpu_custom_call.1']
    #allocation5 [shape = 'u8[49152]{0}', space=vmem, size = 0xc000, scoped, tag = 'input window, operand 3, single buffered']
    #allocation6 [shape = 's32[1]{0}', space=sflag, size = 0x4, scoped, tag = 'scoped memory for tpu_custom_call.1']
    #allocation7 [shape = 'u8[32768]{0}', space=vmem, size = 0x8000, scoped, tag = 'output window, operand 0, single buffered']
    %10 = vsyncpa [#allocation3], 0
    %11 = vsyncpa [#allocation6], 0
    %12 = vsyncpa [#allocation4], 0
    // Predicated region
    $region2: #{tpu_custom_call.1} parent=1 // pred_check
      _
    $region3: #{tpu_custom_call.1} parent=1 // pred_check_branch
      %14 = sbr.rel (0) target = $region5
    $region4: #{tpu_custom_call.1} parent=1 // pred_region
      _
    $region5: #{tpu_custom_call.1} parent=1 // pred_fallthru
      _
    // Predicated region
    $region6: #{tpu_custom_call.1} parent=1 // pred_check
      _
    $region7: #{tpu_custom_call.1} parent=1 // pred_check_branch
      %16 = sbr.rel (0) target = $region9
    $region8: #{tpu_custom_call.1} parent=1 // pred_region
      _
    $region9: #{tpu_custom_call.1} parent=1 // pred_fallthru
      _
    // Predicated region
    $region10: #{tpu_custom_call.1} parent=1 // pred_check
      _
    $region11: #{tpu_custom_call.1} parent=1 // pred_check_branch
      %18 = sbr.rel (0) target = $region13
    $region12: #{tpu_custom_call.1} parent=1 // pred_region
      %s20 = ssub.s32 1536, 1536
      %21 = vsyncadd [#allocation3], %s20
      %s22 = sshll.u32 [#allocation2], 4
      %s23 = int_to_ptr.vmem [resolvable:$true] %s22
      %28 = dma.hbm_to_vmem [thread:$0]  %s2, 1536, %s23, [#allocation3], 128, 128, 8
    $region13: #{tpu_custom_call.1} parent=1 // pred_fallthru
      _
    // Predicated region
    $region14: #{tpu_custom_call.1} parent=1 // pred_check
      _
    $region15: #{tpu_custom_call.1} parent=1 // pred_check_branch
      %30 = sbr.rel (0) target = $region17
    $region16: #{tpu_custom_call.1} parent=1 // pred_region
      %s32 = ssub.s32 1536, 1536
      %33 = vsyncadd [#allocation6], %s32
      %s34 = sshll.u32 [#allocation5], 4
      %s35 = int_to_ptr.vmem [resolvable:$true] %s34
      %40 = dma.hbm_to_vmem [thread:$0]  %s3, 1536, %s35, [#allocation6], 128, 128, 8
    $region17: #{tpu_custom_call.1} parent=1 // pred_fallthru
      _
    // Predicated region
    $region18: #{tpu_custom_call.1} parent=1 // pred_check
      _
    $region19: #{tpu_custom_call.1} parent=1 // pred_check_branch
      %42 = sbr.rel (0) target = $region21
    $region20: #{tpu_custom_call.1} parent=1 // pred_region
      _
    $region21: #{tpu_custom_call.1} parent=1 // pred_fallthru
      _
    // Predicated region
    $region22: #{tpu_custom_call.1} parent=1 // pred_check
      _
    $region23: #{tpu_custom_call.1} parent=1 // pred_check_branch
      %44 = sbr.rel (0) target = $region25
    $region24: #{tpu_custom_call.1} parent=1 // pred_region
      %45 = dma.done [#allocation3], 1536
    $region25: #{tpu_custom_call.1} parent=1 // pred_fallthru
      _
    // Predicated region
    $region26: #{tpu_custom_call.1} parent=1 // pred_check
      _
    $region27: #{tpu_custom_call.1} parent=1 // pred_check_branch
      %47 = sbr.rel (0) target = $region29
    $region28: #{tpu_custom_call.1} parent=1 // pred_region
      %48 = dma.done [#allocation6], 1536
    $region29: #{tpu_custom_call.1} parent=1 // pred_fallthru
      _
    %v49 = vld [vmem:[%s0] sm:$0xff]
    %v50 = vld [vmem:[%s0 + $0x8] sm:$0xff]
    %v51 = vld [vmem:[%s0 + $0x10] sm:$0xff]
    %v52 = vld [vmem:[%s0 + $0x18] sm:$0xff]
    %v53 = vld [vmem:[%s0 + $0x20] sm:$0xff]
    %v54 = vld [vmem:[%s0 + $0x28] sm:$0xff]
    %v55 = vld [vmem:[%s0 + $0x30] sm:$0xff]
    %v56 = vld [vmem:[%s0 + $0x38] sm:$0xff]
    %65 = vrot.lane.b32.xlu0 %v49, 32
    %v66 = vpop.permute.xlu0 %65
    %67 = vrot.lane.b32.xlu0 %v50, 32
    %v68 = vpop.permute.xlu0 %67
    %69 = vrot.lane.b32.xlu0 %v51, 32
    %v70 = vpop.permute.xlu0 %69
    %71 = vrot.lane.b32.xlu0 %v52, 32
    %v72 = vpop.permute.xlu0 %71
    %73 = vrot.lane.b32.xlu0 %v53, 32
    %v74 = vpop.permute.xlu0 %73
    %75 = vrot.lane.b32.xlu0 %v54, 32
    %v76 = vpop.permute.xlu0 %75
    %77 = vrot.lane.b32.xlu0 %v55, 32
    %v78 = vpop.permute.xlu0 %77
    %79 = vrot.lane.b32.xlu0 %v56, 32
    %v80 = vpop.permute.xlu0 %79
    %vm89 = vcmask 392448
    %90 = vst.msk [vmem:[#allocation7] sm:$0xff] %vm89, %v66
    %91 = vst.msk [vmem:[#allocation7 + $0x8] sm:$0xff] %vm89, %v68
    %92 = vst.msk [vmem:[#allocation7 + $0x10] sm:$0xff] %vm89, %v70
    %93 = vst.msk [vmem:[#allocation7 + $0x18] sm:$0xff] %vm89, %v72
    %94 = vst.msk [vmem:[#allocation7 + $0x20] sm:$0xff] %vm89, %v74
    %95 = vst.msk [vmem:[#allocation7 + $0x28] sm:$0xff] %vm89, %v76
    %96 = vst.msk [vmem:[#allocation7 + $0x30] sm:$0xff] %vm89, %v78
    %97 = vst.msk [vmem:[#allocation7 + $0x38] sm:$0xff] %vm89, %v80
    %vm98 = vcmask 1048448
    %99 = vst.msk [vmem:[#allocation7] sm:$0xff] %vm98, 0.0
    %100 = vst.msk [vmem:[#allocation7 + $0x8] sm:$0xff] %vm98, 0.0
    %101 = vst.msk [vmem:[#allocation7 + $0x10] sm:$0xff] %vm98, 0.0
    %102 = vst.msk [vmem:[#allocation7 + $0x18] sm:$0xff] %vm98, 0.0
    %103 = vst.msk [vmem:[#allocation7 + $0x20] sm:$0xff] %vm98, 0.0
    %104 = vst.msk [vmem:[#allocation7 + $0x28] sm:$0xff] %vm98, 0.0
    %105 = vst.msk [vmem:[#allocation7 + $0x30] sm:$0xff] %vm98, 0.0
    %106 = vst.msk [vmem:[#allocation7 + $0x38] sm:$0xff] %vm98, 0.0
    %v107 = vld [vmem:[%s1] sm:$0xff]
    %v108 = vld [vmem:[%s1 + $0x8] sm:$0xff]
    %v109 = vld [vmem:[%s1 + $0x10] sm:$0xff]
    %v110 = vld [vmem:[%s1 + $0x18] sm:$0xff]
    %v111 = vld [vmem:[%s1 + $0x20] sm:$0xff]
    %v112 = vld [vmem:[%s1 + $0x28] sm:$0xff]
    %v113 = vld [vmem:[%s1 + $0x30] sm:$0xff]
    %v114 = vld [vmem:[%s1 + $0x38] sm:$0xff]
    %v115 = vld [vmem:[#allocation2] sm:$0xff]
    %v116 = vld [vmem:[#allocation2 + $0x8] sm:$0xff]
    %v117 = vld [vmem:[#allocation5] sm:$0xff]
    %v118 = vld [vmem:[#allocation5 + $0x8] sm:$0xff]
    %v119 = vld [vmem:[%s4] sm:$0x1]
    %vm120 = vcmask 523264
    %v122 = vsel %vm120, %v107, 0
    %v125 = vsel %vm120, %v108, 0
    %v128 = vsel %vm120, %v109, 0
    %v131 = vsel %vm120, %v110, 0
    %v134 = vsel %vm120, %v111, 0
    %v137 = vsel %vm120, %v112, 0
    %v140 = vsel %vm120, %v113, 0
    %v143 = vsel %vm120, %v114, 0
    %145 = vmatprep.subr.mxu0 0.0
    %146 = vmatpush1.msra.mxu0 %v49
    %147 = vmatprep.subr.mxu0 0.0
    %148 = vmatpush1.msra.mxu0 %v50
    %149 = vmatprep.subr.mxu0 0.0
    %150 = vmatpush1.msra.mxu0 %v51
    %151 = vmatprep.subr.mxu0 0.0
    %152 = vmatpush1.msra.mxu0 %v52
    %153 = vmatprep.subr.mxu0 0.0
    %154 = vmatpush1.msra.mxu0 %v53
    %155 = vmatprep.subr.mxu0 0.0
    %156 = vmatpush1.msra.mxu0 %v54
    %157 = vmatprep.subr.mxu0 0.0
    %158 = vmatpush1.msra.mxu0 %v55
    %159 = vmatprep.subr.mxu0 0.0
    %160 = vmatpush1.msra.mxu0 %v56
    %161 = vmatprep.subr.mxu0 0.0
    %162 = vmatpush1.msra.mxu0 0.0
    %163 = vmatprep.subr.mxu0 0.0
    %164 = vmatpush1.msra.mxu0 0.0
    %165 = vmatprep.subr.mxu0 0.0
    %166 = vmatpush1.msra.mxu0 0.0
    %167 = vmatprep.subr.mxu0 0.0
    %168 = vmatpush1.msra.mxu0 0.0
    %169 = vmatprep.subr.mxu0 0.0
    %170 = vmatpush1.msra.mxu0 0.0
    %171 = vmatprep.subr.mxu0 0.0
    %172 = vmatpush1.msra.mxu0 0.0
    %173 = vmatprep.subr.mxu0 0.0
    %174 = vmatpush1.msra.mxu0 0.0
    %175 = vmatprep.subr.mxu0 0.0
    %176 = vmatpush1.msra.mxu0 0.0
    %177 = vmatprep.subr.mxu0 0.0
    %178 = vmatpush1.msra.mxu0 0.0
    %179 = vmatprep.subr.mxu0 0.0
    %180 = vmatpush1.msra.mxu0 0.0
    %181 = vmatprep.subr.mxu0 0.0
    %182 = vmatpush1.msra.mxu0 0.0
    %183 = vmatprep.subr.mxu0 0.0
    %184 = vmatpush1.msra.mxu0 0.0
    %185 = vmatprep.subr.mxu0 0.0
    %186 = vmatpush1.msra.mxu0 0.0
    %187 = vmatprep.subr.mxu0 0.0
    %188 = vmatpush1.msra.mxu0 0.0
    %189 = vmatprep.subr.mxu0 0.0
    %190 = vmatpush1.msra.mxu0 0.0
    %191 = vmatprep.subr.mxu0 0.0
    %192 = vmatpush1.msra.mxu0 0.0
    %193 = vmatprep.subr.mxu0 0.0
    %194 = vmatpush1.msra.mxu0 0.0
    %195 = vmatprep.subr.mxu0 0.0
    %196 = vmatpush1.msra.mxu0 0.0
    %197 = vmatprep.subr.mxu0 0.0
    %198 = vmatpush1.msra.mxu0 0.0
    %199 = vmatprep.subr.mxu0 0.0
    %200 = vmatpush1.msra.mxu0 0.0
    %201 = vmatprep.subr.mxu0 0.0
    %202 = vmatpush1.msra.mxu0 0.0
    %203 = vmatprep.subr.mxu0 0.0
    %204 = vmatpush1.msra.mxu0 0.0
    %205 = vmatprep.subr.mxu0 0.0
    %206 = vmatpush1.msra.mxu0 0.0
    %207 = vmatprep.subr.mxu0 0.0
    %208 = vmatpush1.msra.mxu0 0.0
    %209 = vmatprep.mubr.f32.mxu0 0.0
    %210 = vmatmul.mubr.f32.gmra.mrb[0].mxu0 %v122
    %v211 = vpop.f32.mrb[0].mxu0
    %v212 = vadd.f32 0.0, %v211
    %v213 = vpop.f32.mrb[0].mxu0
    %214 = vmatprep.mubr.f32.mxu0 0.0
    %215 = vmatmul.mubr.f32.gmra.mrb[0].mxu0 %v125
    %v216 = vpop.f32.mrb[0].mxu0
    %v217 = vadd.f32 0.0, %v216
    %v218 = vpop.f32.mrb[0].mxu0
    %219 = vmatprep.mubr.f32.mxu0 0.0
    %220 = vmatmul.mubr.f32.gmra.mrb[0].mxu0 %v128
    %v221 = vpop.f32.mrb[0].mxu0
    %v222 = vadd.f32 0.0, %v221
    %v223 = vpop.f32.mrb[0].mxu0
    %224 = vmatprep.mubr.f32.mxu0 0.0
    %225 = vmatmul.mubr.f32.gmra.mrb[0].mxu0 %v131
    %v226 = vpop.f32.mrb[0].mxu0
    %v227 = vadd.f32 0.0, %v226
    %v228 = vpop.f32.mrb[0].mxu0
    %229 = vmatprep.mubr.f32.mxu0 0.0
    %230 = vmatmul.mubr.f32.gmra.mrb[0].mxu0 %v134
    %v231 = vpop.f32.mrb[0].mxu0
    %v232 = vadd.f32 0.0, %v231
    %v233 = vpop.f32.mrb[0].mxu0
    %234 = vmatprep.mubr.f32.mxu0 0.0
    %235 = vmatmul.mubr.f32.gmra.mrb[0].mxu0 %v137
    %v236 = vpop.f32.mrb[0].mxu0
    %v237 = vadd.f32 0.0, %v236
    %v238 = vpop.f32.mrb[0].mxu0
    %239 = vmatprep.mubr.f32.mxu0 0.0
    %240 = vmatmul.mubr.f32.gmra.mrb[0].mxu0 %v140
    %v241 = vpop.f32.mrb[0].mxu0
    %v242 = vadd.f32 0.0, %v241
    %v243 = vpop.f32.mrb[0].mxu0
    %244 = vmatprep.mubr.f32.mxu0 0.0
    %245 = vmatmul.mubr.f32.gmra.mrb[0].mxu0 %v143
    %v246 = vpop.f32.mrb[0].mxu0
    %v247 = vadd.f32 0.0, %v246
    %v248 = vpop.f32.mrb[0].mxu0
    %249 = vdwg.mxu0
    %vm250 = vcmask 130048
    %v251 = vsel %vm250, %v49, 0
    %v253 = vsel %vm250, %v50, 0
    %v255 = vsel %vm250, %v51, 0
    %v257 = vsel %vm250, %v52, 0
    %v259 = vsel %vm250, %v53, 0
    %v261 = vsel %vm250, %v54, 0
    %v263 = vsel %vm250, %v55, 0
    %v265 = vsel %vm250, %v56, 0
    %267 = vmatprep.subr.mxu0 0.0
    %268 = vmatpush1.msra.mxu0 %v117
    %269 = vmatprep.subr.mxu0 0.0
    %270 = vmatpush1.msra.mxu0 %v118
    %271 = vmatprep.subr.mxu0 0.0
    %272 = vmatpush1.msra.mxu0 0.0
    %273 = vmatprep.subr.mxu0 0.0
    %274 = vmatpush1.msra.mxu0 0.0
    %275 = vmatprep.subr.mxu0 0.0
    %276 = vmatpush1.msra.mxu0 0.0
    %277 = vmatprep.subr.mxu0 0.0
    %278 = vmatpush1.msra.mxu0 0.0
    %279 = vmatprep.subr.mxu0 0.0
    %280 = vmatpush1.msra.mxu0 0.0
    %281 = vmatprep.subr.mxu0 0.0
    %282 = vmatpush1.msra.mxu0 0.0
    %283 = vmatprep.subr.mxu0 0.0
    %284 = vmatpush1.msra.mxu0 0.0
    %285 = vmatprep.subr.mxu0 0.0
    %286 = vmatpush1.msra.mxu0 0.0
    %287 = vmatprep.subr.mxu0 0.0
    %288 = vmatpush1.msra.mxu0 0.0
    %289 = vmatprep.subr.mxu0 0.0
    %290 = vmatpush1.msra.mxu0 0.0
    %291 = vmatprep.subr.mxu0 0.0
    %292 = vmatpush1.msra.mxu0 0.0
    %293 = vmatprep.subr.mxu0 0.0
    %294 = vmatpush1.msra.mxu0 0.0
    %295 = vmatprep.subr.mxu0 0.0
    %296 = vmatpush1.msra.mxu0 0.0
    %297 = vmatprep.subr.mxu0 0.0
    %298 = vmatpush1.msra.mxu0 0.0
    %299 = vmatprep.subr.mxu0 0.0
    %300 = vmatpush1.msra.mxu0 0.0
    %301 = vmatprep.subr.mxu0 0.0
    %302 = vmatpush1.msra.mxu0 0.0
    %303 = vmatprep.subr.mxu0 0.0
    %304 = vmatpush1.msra.mxu0 0.0
    %305 = vmatprep.subr.mxu0 0.0
    %306 = vmatpush1.msra.mxu0 0.0
    %307 = vmatprep.subr.mxu0 0.0
    %308 = vmatpush1.msra.mxu0 0.0
    %309 = vmatprep.subr.mxu0 0.0
    %310 = vmatpush1.msra.mxu0 0.0
    %311 = vmatprep.subr.mxu0 0.0
    %312 = vmatpush1.msra.mxu0 0.0
    %313 = vmatprep.subr.mxu0 0.0
    %314 = vmatpush1.msra.mxu0 0.0
    %315 = vmatprep.subr.mxu0 0.0
    %316 = vmatpush1.msra.mxu0 0.0
    %317 = vmatprep.subr.mxu0 0.0
    %318 = vmatpush1.msra.mxu0 0.0
    %319 = vmatprep.subr.mxu0 0.0
    %320 = vmatpush1.msra.mxu0 0.0
    %321 = vmatprep.subr.mxu0 0.0
    %322 = vmatpush1.msra.mxu0 0.0
    %323 = vmatprep.subr.mxu0 0.0
    %324 = vmatpush1.msra.mxu0 0.0
    %325 = vmatprep.subr.mxu0 0.0
    %326 = vmatpush1.msra.mxu0 0.0
    %327 = vmatprep.subr.mxu0 0.0
    %328 = vmatpush1.msra.mxu0 0.0
    %329 = vmatprep.subr.mxu0 0.0
    %330 = vmatpush1.msra.mxu0 0.0
    %331 = vmatprep.mubr.f32.mxu0 0.0
    %332 = vmatmul.mubr.f32.gmra.mrb[0].mxu0 %v251
    %v333 = vpop.f32.mrb[0].mxu0
    %v334 = vadd.f32 0.0, %v333
    %v335 = vpop.f32.mrb[0].mxu0
    %336 = vmatprep.mubr.f32.mxu0 0.0
    %337 = vmatmul.mubr.f32.gmra.mrb[0].mxu0 %v253
    %v338 = vpop.f32.mrb[0].mxu0
    %v339 = vadd.f32 0.0, %v338
    %v340 = vpop.f32.mrb[0].mxu0
    %341 = vmatprep.mubr.f32.mxu0 0.0
    %342 = vmatmul.mubr.f32.gmra.mrb[0].mxu0 %v255
    %v343 = vpop.f32.mrb[0].mxu0
    %v344 = vadd.f32 0.0, %v343
    %v345 = vpop.f32.mrb[0].mxu0
    %346 = vmatprep.mubr.f32.mxu0 0.0
    %347 = vmatmul.mubr.f32.gmra.mrb[0].mxu0 %v257
    %v348 = vpop.f32.mrb[0].mxu0
    %v349 = vadd.f32 0.0, %v348
    %v350 = vpop.f32.mrb[0].mxu0
    %351 = vmatprep.mubr.f32.mxu0 0.0
    %352 = vmatmul.mubr.f32.gmra.mrb[0].mxu0 %v259
    %v353 = vpop.f32.mrb[0].mxu0
    %v354 = vadd.f32 0.0, %v353
    %v355 = vpop.f32.mrb[0].mxu0
    %356 = vmatprep.mubr.f32.mxu0 0.0
    %357 = vmatmul.mubr.f32.gmra.mrb[0].mxu0 %v261
    %v358 = vpop.f32.mrb[0].mxu0
    %v359 = vadd.f32 0.0, %v358
    %v360 = vpop.f32.mrb[0].mxu0
    %361 = vmatprep.mubr.f32.mxu0 0.0
    %362 = vmatmul.mubr.f32.gmra.mrb[0].mxu0 %v263
    %v363 = vpop.f32.mrb[0].mxu0
    %v364 = vadd.f32 0.0, %v363
    %v365 = vpop.f32.mrb[0].mxu0
    %366 = vmatprep.mubr.f32.mxu0 0.0
    %367 = vmatmul.mubr.f32.gmra.mrb[0].mxu0 %v265
    %v368 = vpop.f32.mrb[0].mxu0
    %v369 = vadd.f32 0.0, %v368
    %v370 = vpop.f32.mrb[0].mxu0
    %371 = vdwg.mxu0
    %v373 = vsel %vm250, %v212, 0
    %v376 = vsel %vm250, %v217, 0
    %v379 = vsel %vm250, %v222, 0
    %v382 = vsel %vm250, %v227, 0
    %v385 = vsel %vm250, %v232, 0
    %v388 = vsel %vm250, %v237, 0
    %v391 = vsel %vm250, %v242, 0
    %v394 = vsel %vm250, %v247, 0
    %396 = vmatprep.subr.mxu0 0.0
    %397 = vmatpush1.msra.mxu0 %v115
    %398 = vmatprep.subr.mxu0 0.0
    %399 = vmatpush1.msra.mxu0 %v116
    %400 = vmatprep.subr.mxu0 0.0
    %401 = vmatpush1.msra.mxu0 0.0
    %402 = vmatprep.subr.mxu0 0.0
    %403 = vmatpush1.msra.mxu0 0.0
    %404 = vmatprep.subr.mxu0 0.0
    %405 = vmatpush1.msra.mxu0 0.0
    %406 = vmatprep.subr.mxu0 0.0
    %407 = vmatpush1.msra.mxu0 0.0
    %408 = vmatprep.subr.mxu0 0.0
    %409 = vmatpush1.msra.mxu0 0.0
    %410 = vmatprep.subr.mxu0 0.0
    %411 = vmatpush1.msra.mxu0 0.0
    %412 = vmatprep.subr.mxu0 0.0
    %413 = vmatpush1.msra.mxu0 0.0
    %414 = vmatprep.subr.mxu0 0.0
    %415 = vmatpush1.msra.mxu0 0.0
    %416 = vmatprep.subr.mxu0 0.0
    %417 = vmatpush1.msra.mxu0 0.0
    %418 = vmatprep.subr.mxu0 0.0
    %419 = vmatpush1.msra.mxu0 0.0
    %420 = vmatprep.subr.mxu0 0.0
    %421 = vmatpush1.msra.mxu0 0.0
    %422 = vmatprep.subr.mxu0 0.0
    %423 = vmatpush1.msra.mxu0 0.0
    %424 = vmatprep.subr.mxu0 0.0
    %425 = vmatpush1.msra.mxu0 0.0
    %426 = vmatprep.subr.mxu0 0.0
    %427 = vmatpush1.msra.mxu0 0.0
    %428 = vmatprep.subr.mxu0 0.0
    %429 = vmatpush1.msra.mxu0 0.0
    %430 = vmatprep.subr.mxu0 0.0
    %431 = vmatpush1.msra.mxu0 0.0
    %432 = vmatprep.subr.mxu0 0.0
    %433 = vmatpush1.msra.mxu0 0.0
    %434 = vmatprep.subr.mxu0 0.0
    %435 = vmatpush1.msra.mxu0 0.0
    %436 = vmatprep.subr.mxu0 0.0
    %437 = vmatpush1.msra.mxu0 0.0
    %438 = vmatprep.subr.mxu0 0.0
    %439 = vmatpush1.msra.mxu0 0.0
    %440 = vmatprep.subr.mxu0 0.0
    %441 = vmatpush1.msra.mxu0 0.0
    %442 = vmatprep.subr.mxu0 0.0
    %443 = vmatpush1.msra.mxu0 0.0
    %444 = vmatprep.subr.mxu0 0.0
    %445 = vmatpush1.msra.mxu0 0.0
    %446 = vmatprep.subr.mxu0 0.0
    %447 = vmatpush1.msra.mxu0 0.0
    %448 = vmatprep.subr.mxu0 0.0
    %449 = vmatpush1.msra.mxu0 0.0
    %450 = vmatprep.subr.mxu0 0.0
    %451 = vmatpush1.msra.mxu0 0.0
    %452 = vmatprep.subr.mxu0 0.0
    %453 = vmatpush1.msra.mxu0 0.0
    %454 = vmatprep.subr.mxu0 0.0
    %455 = vmatpush1.msra.mxu0 0.0
    %456 = vmatprep.subr.mxu0 0.0
    %457 = vmatpush1.msra.mxu0 0.0
    %458 = vmatprep.subr.mxu0 0.0
    %459 = vmatpush1.msra.mxu0 0.0
    %460 = vmatprep.mubr.f32.mxu0 0.0
    %461 = vmatmul.mubr.f32.gmra.mrb[0].mxu0 %v373
    %v462 = vpop.f32.mrb[0].mxu0
    %v463 = vadd.f32 %v334, %v462
    %v464 = vpop.f32.mrb[0].mxu0
    %465 = vmatprep.mubr.f32.mxu0 0.0
    %466 = vmatmul.mubr.f32.gmra.mrb[0].mxu0 %v376
    %v467 = vpop.f32.mrb[0].mxu0
    %v468 = vadd.f32 %v339, %v467
    %v469 = vpop.f32.mrb[0].mxu0
    %470 = vmatprep.mubr.f32.mxu0 0.0
    %471 = vmatmul.mubr.f32.gmra.mrb[0].mxu0 %v379
    %v472 = vpop.f32.mrb[0].mxu0
    %v473 = vadd.f32 %v344, %v472
    %v474 = vpop.f32.mrb[0].mxu0
    %475 = vmatprep.mubr.f32.mxu0 0.0
    %476 = vmatmul.mubr.f32.gmra.mrb[0].mxu0 %v382
    %v477 = vpop.f32.mrb[0].mxu0
    %v478 = vadd.f32 %v349, %v477
    %v479 = vpop.f32.mrb[0].mxu0
    %480 = vmatprep.mubr.f32.mxu0 0.0
    %481 = vmatmul.mubr.f32.gmra.mrb[0].mxu0 %v385
    %v482 = vpop.f32.mrb[0].mxu0
    %v483 = vadd.f32 %v354, %v482
    %v484 = vpop.f32.mrb[0].mxu0
    %485 = vmatprep.mubr.f32.mxu0 0.0
    %486 = vmatmul.mubr.f32.gmra.mrb[0].mxu0 %v388
    %v487 = vpop.f32.mrb[0].mxu0
    %v488 = vadd.f32 %v359, %v487
    %v489 = vpop.f32.mrb[0].mxu0
    %490 = vmatprep.mubr.f32.mxu0 0.0
    %491 = vmatmul.mubr.f32.gmra.mrb[0].mxu0 %v391
    %v492 = vpop.f32.mrb[0].mxu0
    %v493 = vadd.f32 %v364, %v492
    %v494 = vpop.f32.mrb[0].mxu0
    %495 = vmatprep.mubr.f32.mxu0 0.0
    %496 = vmatmul.mubr.f32.gmra.mrb[0].mxu0 %v394
    %v497 = vpop.f32.mrb[0].mxu0
    %v498 = vadd.f32 %v369, %v497
    %v499 = vpop.f32.mrb[0].mxu0
    %500 = vdwg.mxu0
    %v502 = vlaneseq
    %v503 = vshrl.u32 %v502, 7
    %v504 = vsub.s32 0, %v503
    %v505 = vrot.slane %v119, %v504
    %v507 = vadd.f32 %v463, %v505
    %v508 = vadd.f32 %v468, %v505
    %v509 = vadd.f32 %v473, %v505
    %v510 = vadd.f32 %v478, %v505
    %v511 = vadd.f32 %v483, %v505
    %v512 = vadd.f32 %v488, %v505
    %v513 = vadd.f32 %v493, %v505
    %v514 = vadd.f32 %v498, %v505
    %v515 = vmax.f32 %v507, 0.0
    %v516 = vmax.f32 %v508, 0.0
    %v517 = vmax.f32 %v509, 0.0
    %v518 = vmax.f32 %v510, 0.0
    %v519 = vmax.f32 %v511, 0.0
    %v520 = vmax.f32 %v512, 0.0
    %v521 = vmax.f32 %v513, 0.0
    %v522 = vmax.f32 %v514, 0.0
    %531 = vrot.lane.b32.xlu0 %v515, 48
    %v532 = vpop.permute.xlu0 %531
    %533 = vrot.lane.b32.xlu0 %v516, 48
    %v534 = vpop.permute.xlu0 %533
    %535 = vrot.lane.b32.xlu0 %v517, 48
    %v536 = vpop.permute.xlu0 %535
    %537 = vrot.lane.b32.xlu0 %v518, 48
    %v538 = vpop.permute.xlu0 %537
    %539 = vrot.lane.b32.xlu0 %v519, 48
    %v540 = vpop.permute.xlu0 %539
    %541 = vrot.lane.b32.xlu0 %v520, 48
    %v542 = vpop.permute.xlu0 %541
    %543 = vrot.lane.b32.xlu0 %v521, 48
    %v544 = vpop.permute.xlu0 %543
    %545 = vrot.lane.b32.xlu0 %v522, 48
    %v546 = vpop.permute.xlu0 %545
    %vm555 = vcmask 654720
    %556 = vst.msk [vmem:[#allocation7] sm:$0xff] %vm555, %v532
    %557 = vst.msk [vmem:[#allocation7 + $0x8] sm:$0xff] %vm555, %v534
    %558 = vst.msk [vmem:[#allocation7 + $0x10] sm:$0xff] %vm555, %v536
    %559 = vst.msk [vmem:[#allocation7 + $0x18] sm:$0xff] %vm555, %v538
    %560 = vst.msk [vmem:[#allocation7 + $0x20] sm:$0xff] %vm555, %v540
    %561 = vst.msk [vmem:[#allocation7 + $0x28] sm:$0xff] %vm555, %v542
    %562 = vst.msk [vmem:[#allocation7 + $0x30] sm:$0xff] %vm555, %v544
    %563 = vst.msk [vmem:[#allocation7 + $0x38] sm:$0xff] %vm555, %v546
    %s564 = scalar_lea.vmem [#allocation2], 32
    %v565 = vld [vmem:[%s564] sm:$0xff]
    %v566 = vld [vmem:[%s564 + $0x8] sm:$0xff]
    %v567 = vld [vmem:[%s564 + $0x10] sm:$0xff]
    %v568 = vld [vmem:[%s564 + $0x18] sm:$0xff]
    %s569 = scalar_lea.vmem [#allocation5], 32
    %v570 = vld [vmem:[%s569] sm:$0xff]
    %v571 = vld [vmem:[%s569 + $0x8] sm:$0xff]
    %v572 = vld [vmem:[%s569 + $0x10] sm:$0xff]
    %v573 = vld [vmem:[%s569 + $0x18] sm:$0xff]
    %s574 = scalar_lea.vmem %s4, 1
    %v575 = vld [vmem:[%s574] sm:$0x1]
    %576 = vmatprep.subr.mxu0 0.0
    %577 = vmatpush1.msra.mxu0 %v515
    %578 = vmatprep.subr.mxu0 0.0
    %579 = vmatpush1.msra.mxu0 %v516
    %580 = vmatprep.subr.mxu0 0.0
    %581 = vmatpush1.msra.mxu0 %v517
    %582 = vmatprep.subr.mxu0 0.0
    %583 = vmatpush1.msra.mxu0 %v518
    %584 = vmatprep.subr.mxu0 0.0
    %585 = vmatpush1.msra.mxu0 %v519
    %586 = vmatprep.subr.mxu0 0.0
    %587 = vmatpush1.msra.mxu0 %v520
    %588 = vmatprep.subr.mxu0 0.0
    %589 = vmatpush1.msra.mxu0 %v521
    %590 = vmatprep.subr.mxu0 0.0
    %591 = vmatpush1.msra.mxu0 %v522
    %592 = vmatprep.subr.mxu0 0.0
    %593 = vmatpush1.msra.mxu0 0.0
    %594 = vmatprep.subr.mxu0 0.0
    %595 = vmatpush1.msra.mxu0 0.0
    %596 = vmatprep.subr.mxu0 0.0
    %597 = vmatpush1.msra.mxu0 0.0
    %598 = vmatprep.subr.mxu0 0.0
    %599 = vmatpush1.msra.mxu0 0.0
    %600 = vmatprep.subr.mxu0 0.0
    %601 = vmatpush1.msra.mxu0 0.0
    %602 = vmatprep.subr.mxu0 0.0
    %603 = vmatpush1.msra.mxu0 0.0
    %604 = vmatprep.subr.mxu0 0.0
    %605 = vmatpush1.msra.mxu0 0.0
    %606 = vmatprep.subr.mxu0 0.0
    %607 = vmatpush1.msra.mxu0 0.0
    %608 = vmatprep.subr.mxu0 0.0
    %609 = vmatpush1.msra.mxu0 0.0
    %610 = vmatprep.subr.mxu0 0.0
    %611 = vmatpush1.msra.mxu0 0.0
    %612 = vmatprep.subr.mxu0 0.0
    %613 = vmatpush1.msra.mxu0 0.0
    %614 = vmatprep.subr.mxu0 0.0
    %615 = vmatpush1.msra.mxu0 0.0
    %616 = vmatprep.subr.mxu0 0.0
    %617 = vmatpush1.msra.mxu0 0.0
    %618 = vmatprep.subr.mxu0 0.0
    %619 = vmatpush1.msra.mxu0 0.0
    %620 = vmatprep.subr.mxu0 0.0
    %621 = vmatpush1.msra.mxu0 0.0
    %622 = vmatprep.subr.mxu0 0.0
    %623 = vmatpush1.msra.mxu0 0.0
    %624 = vmatprep.subr.mxu0 0.0
    %625 = vmatpush1.msra.mxu0 0.0
    %626 = vmatprep.subr.mxu0 0.0
    %627 = vmatpush1.msra.mxu0 0.0
    %628 = vmatprep.subr.mxu0 0.0
    %629 = vmatpush1.msra.mxu0 0.0
    %630 = vmatprep.subr.mxu0 0.0
    %631 = vmatpush1.msra.mxu0 0.0
    %632 = vmatprep.subr.mxu0 0.0
    %633 = vmatpush1.msra.mxu0 0.0
    %634 = vmatprep.subr.mxu0 0.0
    %635 = vmatpush1.msra.mxu0 0.0
    %636 = vmatprep.subr.mxu0 0.0
    %637 = vmatpush1.msra.mxu0 0.0
    %638 = vmatprep.subr.mxu0 0.0
    %639 = vmatpush1.msra.mxu0 0.0
    %640 = vmatprep.mubr.f32.mxu0 0.0
    %641 = vmatmul.mubr.f32.gmra.mrb[0].mxu0 %v122
    %v642 = vpop.f32.mrb[0].mxu0
    %v643 = vadd.f32 0.0, %v642
    %v644 = vpop.f32.mrb[0].mxu0
    %645 = vmatprep.mubr.f32.mxu0 0.0
    %646 = vmatmul.mubr.f32.gmra.mrb[0].mxu0 %v125
    %v647 = vpop.f32.mrb[0].mxu0
    %v648 = vadd.f32 0.0, %v647
    %v649 = vpop.f32.mrb[0].mxu0
    %650 = vmatprep.mubr.f32.mxu0 0.0
    %651 = vmatmul.mubr.f32.gmra.mrb[0].mxu0 %v128
    %v652 = vpop.f32.mrb[0].mxu0
    %v653 = vadd.f32 0.0, %v652
    %v654 = vpop.f32.mrb[0].mxu0
    %655 = vmatprep.mubr.f32.mxu0 0.0
    %656 = vmatmul.mubr.f32.gmra.mrb[0].mxu0 %v131
    %v657 = vpop.f32.mrb[0].mxu0
    %v658 = vadd.f32 0.0, %v657
    %v659 = vpop.f32.mrb[0].mxu0
    %660 = vmatprep.mubr.f32.mxu0 0.0
    %661 = vmatmul.mubr.f32.gmra.mrb[0].mxu0 %v134
    %v662 = vpop.f32.mrb[0].mxu0
    %v663 = vadd.f32 0.0, %v662
    %v664 = vpop.f32.mrb[0].mxu0
    %665 = vmatprep.mubr.f32.mxu0 0.0
    %666 = vmatmul.mubr.f32.gmra.mrb[0].mxu0 %v137
    %v667 = vpop.f32.mrb[0].mxu0
    %v668 = vadd.f32 0.0, %v667
    %v669 = vpop.f32.mrb[0].mxu0
    %670 = vmatprep.mubr.f32.mxu0 0.0
    %671 = vmatmul.mubr.f32.gmra.mrb[0].mxu0 %v140
    %v672 = vpop.f32.mrb[0].mxu0
    %v673 = vadd.f32 0.0, %v672
    %v674 = vpop.f32.mrb[0].mxu0
    %675 = vmatprep.mubr.f32.mxu0 0.0
    %676 = vmatmul.mubr.f32.gmra.mrb[0].mxu0 %v143
    %v677 = vpop.f32.mrb[0].mxu0
    %v678 = vadd.f32 0.0, %v677
    %v679 = vpop.f32.mrb[0].mxu0
    %680 = vdwg.mxu0
    %vm681 = vcmask 261120
    %v682 = vsel %vm681, %v515, 0
    %v684 = vsel %vm681, %v516, 0
    %v686 = vsel %vm681, %v517, 0
    %v688 = vsel %vm681, %v518, 0
    %v690 = vsel %vm681, %v519, 0
    %v692 = vsel %vm681, %v520, 0
    %v694 = vsel %vm681, %v521, 0
    %v696 = vsel %vm681, %v522, 0
    %698 = vmatprep.subr.mxu0 0.0
    %699 = vmatpush1.msra.mxu0 %v570
    %700 = vmatprep.subr.mxu0 0.0
    %701 = vmatpush1.msra.mxu0 %v571
    %702 = vmatprep.subr.mxu0 0.0
    %703 = vmatpush1.msra.mxu0 %v572
    %704 = vmatprep.subr.mxu0 0.0
    %705 = vmatpush1.msra.mxu0 %v573
    %706 = vmatprep.subr.mxu0 0.0
    %707 = vmatpush1.msra.mxu0 0.0
    %708 = vmatprep.subr.mxu0 0.0
    %709 = vmatpush1.msra.mxu0 0.0
    %710 = vmatprep.subr.mxu0 0.0
    %711 = vmatpush1.msra.mxu0 0.0
    %712 = vmatprep.subr.mxu0 0.0
    %713 = vmatpush1.msra.mxu0 0.0
    %714 = vmatprep.subr.mxu0 0.0
    %715 = vmatpush1.msra.mxu0 0.0
    %716 = vmatprep.subr.mxu0 0.0
    %717 = vmatpush1.msra.mxu0 0.0
    %718 = vmatprep.subr.mxu0 0.0
    %719 = vmatpush1.msra.mxu0 0.0
    %720 = vmatprep.subr.mxu0 0.0
    %721 = vmatpush1.msra.mxu0 0.0
    %722 = vmatprep.subr.mxu0 0.0
    %723 = vmatpush1.msra.mxu0 0.0
    %724 = vmatprep.subr.mxu0 0.0
    %725 = vmatpush1.msra.mxu0 0.0
    %726 = vmatprep.subr.mxu0 0.0
    %727 = vmatpush1.msra.mxu0 0.0
    %728 = vmatprep.subr.mxu0 0.0
    %729 = vmatpush1.msra.mxu0 0.0
    %730 = vmatprep.subr.mxu0 0.0
    %731 = vmatpush1.msra.mxu0 0.0
    %732 = vmatprep.subr.mxu0 0.0
    %733 = vmatpush1.msra.mxu0 0.0
    %734 = vmatprep.subr.mxu0 0.0
    %735 = vmatpush1.msra.mxu0 0.0
    %736 = vmatprep.subr.mxu0 0.0
    %737 = vmatpush1.msra.mxu0 0.0
    %738 = vmatprep.subr.mxu0 0.0
    %739 = vmatpush1.msra.mxu0 0.0
    %740 = vmatprep.subr.mxu0 0.0
    %741 = vmatpush1.msra.mxu0 0.0
    %742 = vmatprep.subr.mxu0 0.0
    %743 = vmatpush1.msra.mxu0 0.0
    %744 = vmatprep.subr.mxu0 0.0
    %745 = vmatpush1.msra.mxu0 0.0
    %746 = vmatprep.subr.mxu0 0.0
    %747 = vmatpush1.msra.mxu0 0.0
    %748 = vmatprep.subr.mxu0 0.0
    %749 = vmatpush1.msra.mxu0 0.0
    %750 = vmatprep.subr.mxu0 0.0
    %751 = vmatpush1.msra.mxu0 0.0
    %752 = vmatprep.subr.mxu0 0.0
    %753 = vmatpush1.msra.mxu0 0.0
    %754 = vmatprep.subr.mxu0 0.0
    %755 = vmatpush1.msra.mxu0 0.0
    %756 = vmatprep.subr.mxu0 0.0
    %757 = vmatpush1.msra.mxu0 0.0
    %758 = vmatprep.subr.mxu0 0.0
    %759 = vmatpush1.msra.mxu0 0.0
    %760 = vmatprep.subr.mxu0 0.0
    %761 = vmatpush1.msra.mxu0 0.0
    %762 = vmatprep.mubr.f32.mxu0 0.0
    %763 = vmatmul.mubr.f32.gmra.mrb[0].mxu0 %v682
    %v764 = vpop.f32.mrb[0].mxu0
    %v765 = vadd.f32 0.0, %v764
    %v766 = vpop.f32.mrb[0].mxu0
    %767 = vmatprep.mubr.f32.mxu0 0.0
    %768 = vmatmul.mubr.f32.gmra.mrb[0].mxu0 %v684
    %v769 = vpop.f32.mrb[0].mxu0
    %v770 = vadd.f32 0.0, %v769
    %v771 = vpop.f32.mrb[0].mxu0
    %772 = vmatprep.mubr.f32.mxu0 0.0
    %773 = vmatmul.mubr.f32.gmra.mrb[0].mxu0 %v686
    %v774 = vpop.f32.mrb[0].mxu0
    %v775 = vadd.f32 0.0, %v774
    %v776 = vpop.f32.mrb[0].mxu0
    %777 = vmatprep.mubr.f32.mxu0 0.0
    %778 = vmatmul.mubr.f32.gmra.mrb[0].mxu0 %v688
    %v779 = vpop.f32.mrb[0].mxu0
    %v780 = vadd.f32 0.0, %v779
    %v781 = vpop.f32.mrb[0].mxu0
    %782 = vmatprep.mubr.f32.mxu0 0.0
    %783 = vmatmul.mubr.f32.gmra.mrb[0].mxu0 %v690
    %v784 = vpop.f32.mrb[0].mxu0
    %v785 = vadd.f32 0.0, %v784
    %v786 = vpop.f32.mrb[0].mxu0
    %787 = vmatprep.mubr.f32.mxu0 0.0
    %788 = vmatmul.mubr.f32.gmra.mrb[0].mxu0 %v692
    %v789 = vpop.f32.mrb[0].mxu0
    %v790 = vadd.f32 0.0, %v789
    %v791 = vpop.f32.mrb[0].mxu0
    %792 = vmatprep.mubr.f32.mxu0 0.0
    %793 = vmatmul.mubr.f32.gmra.mrb[0].mxu0 %v694
    %v794 = vpop.f32.mrb[0].mxu0
    %v795 = vadd.f32 0.0, %v794
    %v796 = vpop.f32.mrb[0].mxu0
    %797 = vmatprep.mubr.f32.mxu0 0.0
    %798 = vmatmul.mubr.f32.gmra.mrb[0].mxu0 %v696
    %v799 = vpop.f32.mrb[0].mxu0
    %v800 = vadd.f32 0.0, %v799
    %v801 = vpop.f32.mrb[0].mxu0
    %802 = vdwg.mxu0
    %v804 = vsel %vm681, %v643, 0
    %v807 = vsel %vm681, %v648, 0
    %v810 = vsel %vm681, %v653, 0
    %v813 = vsel %vm681, %v658, 0
    %v816 = vsel %vm681, %v663, 0
    %v819 = vsel %vm681, %v668, 0
    %v822 = vsel %vm681, %v673, 0
    %v825 = vsel %vm681, %v678, 0
    %827 = vmatprep.subr.mxu0 0.0
    %828 = vmatpush1.msra.mxu0 %v565
    %829 = vmatprep.subr.mxu0 0.0
    %830 = vmatpush1.msra.mxu0 %v566
    %831 = vmatprep.subr.mxu0 0.0
    %832 = vmatpush1.msra.mxu0 %v567
    %833 = vmatprep.subr.mxu0 0.0
    %834 = vmatpush1.msra.mxu0 %v568
    %835 = vmatprep.subr.mxu0 0.0
    %836 = vmatpush1.msra.mxu0 0.0
    %837 = vmatprep.subr.mxu0 0.0
    %838 = vmatpush1.msra.mxu0 0.0
    %839 = vmatprep.subr.mxu0 0.0
    %840 = vmatpush1.msra.mxu0 0.0
    %841 = vmatprep.subr.mxu0 0.0
    %842 = vmatpush1.msra.mxu0 0.0
    %843 = vmatprep.subr.mxu0 0.0
    %844 = vmatpush1.msra.mxu0 0.0
    %845 = vmatprep.subr.mxu0 0.0
    %846 = vmatpush1.msra.mxu0 0.0
    %847 = vmatprep.subr.mxu0 0.0
    %848 = vmatpush1.msra.mxu0 0.0
    %849 = vmatprep.subr.mxu0 0.0
    %850 = vmatpush1.msra.mxu0 0.0
    %851 = vmatprep.subr.mxu0 0.0
    %852 = vmatpush1.msra.mxu0 0.0
    %853 = vmatprep.subr.mxu0 0.0
    %854 = vmatpush1.msra.mxu0 0.0
    %855 = vmatprep.subr.mxu0 0.0
    %856 = vmatpush1.msra.mxu0 0.0
    %857 = vmatprep.subr.mxu0 0.0
    %858 = vmatpush1.msra.mxu0 0.0
    %859 = vmatprep.subr.mxu0 0.0
    %860 = vmatpush1.msra.mxu0 0.0
    %861 = vmatprep.subr.mxu0 0.0
    %862 = vmatpush1.msra.mxu0 0.0
    %863 = vmatprep.subr.mxu0 0.0
    %864 = vmatpush1.msra.mxu0 0.0
    %865 = vmatprep.subr.mxu0 0.0
    %866 = vmatpush1.msra.mxu0 0.0
    %867 = vmatprep.subr.mxu0 0.0
    %868 = vmatpush1.msra.mxu0 0.0
    %869 = vmatprep.subr.mxu0 0.0
    %870 = vmatpush1.msra.mxu0 0.0
    %871 = vmatprep.subr.mxu0 0.0
    %872 = vmatpush1.msra.mxu0 0.0
    %873 = vmatprep.subr.mxu0 0.0
    %874 = vmatpush1.msra.mxu0 0.0
    %875 = vmatprep.subr.mxu0 0.0
    %876 = vmatpush1.msra.mxu0 0.0
    %877 = vmatprep.subr.mxu0 0.0
    %878 = vmatpush1.msra.mxu0 0.0
    %879 = vmatprep.subr.mxu0 0.0
    %880 = vmatpush1.msra.mxu0 0.0
    %881 = vmatprep.subr.mxu0 0.0
    %882 = vmatpush1.msra.mxu0 0.0
    %883 = vmatprep.subr.mxu0 0.0
    %884 = vmatpush1.msra.mxu0 0.0
    %885 = vmatprep.subr.mxu0 0.0
    %886 = vmatpush1.msra.mxu0 0.0
    %887 = vmatprep.subr.mxu0 0.0
    %888 = vmatpush1.msra.mxu0 0.0
    %889 = vmatprep.subr.mxu0 0.0
    %890 = vmatpush1.msra.mxu0 0.0
    %891 = vmatprep.mubr.f32.mxu0 0.0
    %892 = vmatmul.mubr.f32.gmra.mrb[0].mxu0 %v804
    %v893 = vpop.f32.mrb[0].mxu0
    %v894 = vadd.f32 %v765, %v893
    %v895 = vpop.f32.mrb[0].mxu0
    %896 = vmatprep.mubr.f32.mxu0 0.0
    %897 = vmatmul.mubr.f32.gmra.mrb[0].mxu0 %v807
    %v898 = vpop.f32.mrb[0].mxu0
    %v899 = vadd.f32 %v770, %v898
    %v900 = vpop.f32.mrb[0].mxu0
    %901 = vmatprep.mubr.f32.mxu0 0.0
    %902 = vmatmul.mubr.f32.gmra.mrb[0].mxu0 %v810
    %v903 = vpop.f32.mrb[0].mxu0
    %v904 = vadd.f32 %v775, %v903
    %v905 = vpop.f32.mrb[0].mxu0
    %906 = vmatprep.mubr.f32.mxu0 0.0
    %907 = vmatmul.mubr.f32.gmra.mrb[0].mxu0 %v813
    %v908 = vpop.f32.mrb[0].mxu0
    %v909 = vadd.f32 %v780, %v908
    %v910 = vpop.f32.mrb[0].mxu0
    %911 = vmatprep.mubr.f32.mxu0 0.0
    %912 = vmatmul.mubr.f32.gmra.mrb[0].mxu0 %v816
    %v913 = vpop.f32.mrb[0].mxu0
    %v914 = vadd.f32 %v785, %v913
    %v915 = vpop.f32.mrb[0].mxu0
    %916 = vmatprep.mubr.f32.mxu0 0.0
    %917 = vmatmul.mubr.f32.gmra.mrb[0].mxu0 %v819
    %v918 = vpop.f32.mrb[0].mxu0
    %v919 = vadd.f32 %v790, %v918
    %v920 = vpop.f32.mrb[0].mxu0
    %921 = vmatprep.mubr.f32.mxu0 0.0
    %922 = vmatmul.mubr.f32.gmra.mrb[0].mxu0 %v822
    %v923 = vpop.f32.mrb[0].mxu0
    %v924 = vadd.f32 %v795, %v923
    %v925 = vpop.f32.mrb[0].mxu0
    %926 = vmatprep.mubr.f32.mxu0 0.0
    %927 = vmatmul.mubr.f32.gmra.mrb[0].mxu0 %v825
    %v928 = vpop.f32.mrb[0].mxu0
    %v929 = vadd.f32 %v800, %v928
    %v930 = vpop.f32.mrb[0].mxu0
    %931 = vdwg.mxu0
    %v933 = vlaneseq
    %v934 = vshrl.u32 %v933, 7
    %v935 = vsub.s32 0, %v934
    %v936 = vrot.slane %v575, %v935
    %v938 = vadd.f32 %v894, %v936
    %v939 = vadd.f32 %v899, %v936
    %v940 = vadd.f32 %v904, %v936
    %v941 = vadd.f32 %v909, %v936
    %v942 = vadd.f32 %v914, %v936
    %v943 = vadd.f32 %v919, %v936
    %v944 = vadd.f32 %v924, %v936
    %v945 = vadd.f32 %v929, %v936
    %v946 = vmax.f32 %v938, 0.0
    %v947 = vmax.f32 %v939, 0.0
    %v948 = vmax.f32 %v940, 0.0
    %v949 = vmax.f32 %v941, 0.0
    %v950 = vmax.f32 %v942, 0.0
    %v951 = vmax.f32 %v943, 0.0
    %v952 = vmax.f32 %v944, 0.0
    %v953 = vmax.f32 %v945, 0.0
    %962 = vrot.lane.b32.xlu0 %v946, 80
    %v963 = vpop.permute.xlu0 %962
    %964 = vrot.lane.b32.xlu0 %v947, 80
    %v965 = vpop.permute.xlu0 %964
    %966 = vrot.lane.b32.xlu0 %v948, 80
    %v967 = vpop.permute.xlu0 %966
    %968 = vrot.lane.b32.xlu0 %v949, 80
    %v969 = vpop.permute.xlu0 %968
    %970 = vrot.lane.b32.xlu0 %v950, 80
    %v971 = vpop.permute.xlu0 %970
    %972 = vrot.lane.b32.xlu0 %v951, 80
    %v973 = vpop.permute.xlu0 %972
    %974 = vrot.lane.b32.xlu0 %v952, 80
    %v975 = vpop.permute.xlu0 %974
    %976 = vrot.lane.b32.xlu0 %v953, 80
    %v977 = vpop.permute.xlu0 %976
    %vm986 = vcmask 917120
    %987 = vst.msk [vmem:[#allocation7] sm:$0xff] %vm986, %v963
    %988 = vst.msk [vmem:[#allocation7 + $0x8] sm:$0xff] %vm986, %v965
    %989 = vst.msk [vmem:[#allocation7 + $0x10] sm:$0xff] %vm986, %v967
    %990 = vst.msk [vmem:[#allocation7 + $0x18] sm:$0xff] %vm986, %v969
    %991 = vst.msk [vmem:[#allocation7 + $0x20] sm:$0xff] %vm986, %v971
    %992 = vst.msk [vmem:[#allocation7 + $0x28] sm:$0xff] %vm986, %v973
    %993 = vst.msk [vmem:[#allocation7 + $0x30] sm:$0xff] %vm986, %v975
    %994 = vst.msk [vmem:[#allocation7 + $0x38] sm:$0xff] %vm986, %v977
    %s995 = scalar_lea.vmem [#allocation2], 64
    %v996 = vld [vmem:[%s995] sm:$0xff]
    %v997 = vld [vmem:[%s995 + $0x8] sm:$0xff]
    %v998 = vld [vmem:[%s995 + $0x10] sm:$0xff]
    %v999 = vld [vmem:[%s995 + $0x18] sm:$0xff]
    %s1000 = scalar_lea.vmem [#allocation5], 64
    %v1001 = vld [vmem:[%s1000] sm:$0xff]
    %v1002 = vld [vmem:[%s1000 + $0x8] sm:$0xff]
    %v1003 = vld [vmem:[%s1000 + $0x10] sm:$0xff]
    %v1004 = vld [vmem:[%s1000 + $0x18] sm:$0xff]
    %s1005 = scalar_lea.vmem %s4, 2
    %v1006 = vld [vmem:[%s1005] sm:$0x1]
    %1007 = vmatprep.subr.mxu0 0.0
    %1008 = vmatpush1.msra.mxu0 %v946
    %1009 = vmatprep.subr.mxu0 0.0
    %1010 = vmatpush1.msra.mxu0 %v947
    %1011 = vmatprep.subr.mxu0 0.0
    %1012 = vmatpush1.msra.mxu0 %v948
    %1013 = vmatprep.subr.mxu0 0.0
    %1014 = vmatpush1.msra.mxu0 %v949
    %1015 = vmatprep.subr.mxu0 0.0
    %1016 = vmatpush1.msra.mxu0 %v950
    %1017 = vmatprep.subr.mxu0 0.0
    %1018 = vmatpush1.msra.mxu0 %v951
    %1019 = vmatprep.subr.mxu0 0.0
    %1020 = vmatpush1.msra.mxu0 %v952
    %1021 = vmatprep.subr.mxu0 0.0
    %1022 = vmatpush1.msra.mxu0 %v953
    %1023 = vmatprep.subr.mxu0 0.0
    %1024 = vmatpush1.msra.mxu0 0.0
    %1025 = vmatprep.subr.mxu0 0.0
    %1026 = vmatpush1.msra.mxu0 0.0
    %1027 = vmatprep.subr.mxu0 0.0
    %1028 = vmatpush1.msra.mxu0 0.0
    %1029 = vmatprep.subr.mxu0 0.0
    %1030 = vmatpush1.msra.mxu0 0.0
    %1031 = vmatprep.subr.mxu0 0.0
    %1032 = vmatpush1.msra.mxu0 0.0
    %1033 = vmatprep.subr.mxu0 0.0
    %1034 = vmatpush1.msra.mxu0 0.0
    %1035 = vmatprep.subr.mxu0 0.0
    %1036 = vmatpush1.msra.mxu0 0.0
    %1037 = vmatprep.subr.mxu0 0.0
    %1038 = vmatpush1.msra.mxu0 0.0
    %1039 = vmatprep.subr.mxu0 0.0
    %1040 = vmatpush1.msra.mxu0 0.0
    %1041 = vmatprep.subr.mxu0 0.0
    %1042 = vmatpush1.msra.mxu0 0.0
    %1043 = vmatprep.subr.mxu0 0.0
    %1044 = vmatpush1.msra.mxu0 0.0
    %1045 = vmatprep.subr.mxu0 0.0
    %1046 = vmatpush1.msra.mxu0 0.0
    %1047 = vmatprep.subr.mxu0 0.0
    %1048 = vmatpush1.msra.mxu0 0.0
    %1049 = vmatprep.subr.mxu0 0.0
    %1050 = vmatpush1.msra.mxu0 0.0
    %1051 = vmatprep.subr.mxu0 0.0
    %1052 = vmatpush1.msra.mxu0 0.0
    %1053 = vmatprep.subr.mxu0 0.0
    %1054 = vmatpush1.msra.mxu0 0.0
    %1055 = vmatprep.subr.mxu0 0.0
    %1056 = vmatpush1.msra.mxu0 0.0
    %1057 = vmatprep.subr.mxu0 0.0
    %1058 = vmatpush1.msra.mxu0 0.0
    %1059 = vmatprep.subr.mxu0 0.0
    %1060 = vmatpush1.msra.mxu0 0.0
    %1061 = vmatprep.subr.mxu0 0.0
    %1062 = vmatpush1.msra.mxu0 0.0
    %1063 = vmatprep.subr.mxu0 0.0
    %1064 = vmatpush1.msra.mxu0 0.0
    %1065 = vmatprep.subr.mxu0 0.0
    %1066 = vmatpush1.msra.mxu0 0.0
    %1067 = vmatprep.subr.mxu0 0.0
    %1068 = vmatpush1.msra.mxu0 0.0
    %1069 = vmatprep.subr.mxu0 0.0
    %1070 = vmatpush1.msra.mxu0 0.0
    %1071 = vmatprep.mubr.f32.mxu0 0.0
    %1072 = vmatmul.mubr.f32.gmra.mrb[0].mxu0 %v122
    %v1073 = vpop.f32.mrb[0].mxu0
    %v1074 = vadd.f32 0.0, %v1073
    %v1075 = vpop.f32.mrb[0].mxu0
    %1076 = vmatprep.mubr.f32.mxu0 0.0
    %1077 = vmatmul.mubr.f32.gmra.mrb[0].mxu0 %v125
    %v1078 = vpop.f32.mrb[0].mxu0
    %v1079 = vadd.f32 0.0, %v1078
    %v1080 = vpop.f32.mrb[0].mxu0
    %1081 = vmatprep.mubr.f32.mxu0 0.0
    %1082 = vmatmul.mubr.f32.gmra.mrb[0].mxu0 %v128
    %v1083 = vpop.f32.mrb[0].mxu0
    %v1084 = vadd.f32 0.0, %v1083
    %v1085 = vpop.f32.mrb[0].mxu0
    %1086 = vmatprep.mubr.f32.mxu0 0.0
    %1087 = vmatmul.mubr.f32.gmra.mrb[0].mxu0 %v131
    %v1088 = vpop.f32.mrb[0].mxu0
    %v1089 = vadd.f32 0.0, %v1088
    %v1090 = vpop.f32.mrb[0].mxu0
    %1091 = vmatprep.mubr.f32.mxu0 0.0
    %1092 = vmatmul.mubr.f32.gmra.mrb[0].mxu0 %v134
    %v1093 = vpop.f32.mrb[0].mxu0
    %v1094 = vadd.f32 0.0, %v1093
    %v1095 = vpop.f32.mrb[0].mxu0
    %1096 = vmatprep.mubr.f32.mxu0 0.0
    %1097 = vmatmul.mubr.f32.gmra.mrb[0].mxu0 %v137
    %v1098 = vpop.f32.mrb[0].mxu0
    %v1099 = vadd.f32 0.0, %v1098
    %v1100 = vpop.f32.mrb[0].mxu0
    %1101 = vmatprep.mubr.f32.mxu0 0.0
    %1102 = vmatmul.mubr.f32.gmra.mrb[0].mxu0 %v140
    %v1103 = vpop.f32.mrb[0].mxu0
    %v1104 = vadd.f32 0.0, %v1103
    %v1105 = vpop.f32.mrb[0].mxu0
    %1106 = vmatprep.mubr.f32.mxu0 0.0
    %1107 = vmatmul.mubr.f32.gmra.mrb[0].mxu0 %v143
    %v1108 = vpop.f32.mrb[0].mxu0
    %v1109 = vadd.f32 0.0, %v1108
    %v1110 = vpop.f32.mrb[0].mxu0
    %1111 = vdwg.mxu0
    %v1112 = vsel %vm681, %v946, 0
    %v1114 = vsel %vm681, %v947, 0
    %v1116 = vsel %vm681, %v948, 0
    %v1118 = vsel %vm681, %v949, 0
    %v1120 = vsel %vm681, %v950, 0
    %v1122 = vsel %vm681, %v951, 0
    %v1124 = vsel %vm681, %v952, 0
    %v1126 = vsel %vm681, %v953, 0
    %1128 = vmatprep.subr.mxu0 0.0
    %1129 = vmatpush1.msra.mxu0 %v1001
    %1130 = vmatprep.subr.mxu0 0.0
    %1131 = vmatpush1.msra.mxu0 %v1002
    %1132 = vmatprep.subr.mxu0 0.0
    %1133 = vmatpush1.msra.mxu0 %v1003
    %1134 = vmatprep.subr.mxu0 0.0
    %1135 = vmatpush1.msra.mxu0 %v1004
    %1136 = vmatprep.subr.mxu0 0.0
    %1137 = vmatpush1.msra.mxu0 0.0
    %1138 = vmatprep.subr.mxu0 0.0
    %1139 = vmatpush1.msra.mxu0 0.0
    %1140 = vmatprep.subr.mxu0 0.0
    %1141 = vmatpush1.msra.mxu0 0.0
    %1142 = vmatprep.subr.mxu0 0.0
    %1143 = vmatpush1.msra.mxu0 0.0
    %1144 = vmatprep.subr.mxu0 0.0
    %1145 = vmatpush1.msra.mxu0 0.0
    %1146 = vmatprep.subr.mxu0 0.0
    %1147 = vmatpush1.msra.mxu0 0.0
    %1148 = vmatprep.subr.mxu0 0.0
    %1149 = vmatpush1.msra.mxu0 0.0
    %1150 = vmatprep.subr.mxu0 0.0
    %1151 = vmatpush1.msra.mxu0 0.0
    %1152 = vmatprep.subr.mxu0 0.0
    %1153 = vmatpush1.msra.mxu0 0.0
    %1154 = vmatprep.subr.mxu0 0.0
    %1155 = vmatpush1.msra.mxu0 0.0
    %1156 = vmatprep.subr.mxu0 0.0
    %1157 = vmatpush1.msra.mxu0 0.0
    %1158 = vmatprep.subr.mxu0 0.0
    %1159 = vmatpush1.msra.mxu0 0.0
    %1160 = vmatprep.subr.mxu0 0.0
    %1161 = vmatpush1.msra.mxu0 0.0
    %1162 = vmatprep.subr.mxu0 0.0
    %1163 = vmatpush1.msra.mxu0 0.0
    %1164 = vmatprep.subr.mxu0 0.0
    %1165 = vmatpush1.msra.mxu0 0.0
    %1166 = vmatprep.subr.mxu0 0.0
    %1167 = vmatpush1.msra.mxu0 0.0
    %1168 = vmatprep.subr.mxu0 0.0
    %1169 = vmatpush1.msra.mxu0 0.0
    %1170 = vmatprep.subr.mxu0 0.0
    %1171 = vmatpush1.msra.mxu0 0.0
    %1172 = vmatprep.subr.mxu0 0.0
    %1173 = vmatpush1.msra.mxu0 0.0
    %1174 = vmatprep.subr.mxu0 0.0
    %1175 = vmatpush1.msra.mxu0 0.0
    %1176 = vmatprep.subr.mxu0 0.0
    %1177 = vmatpush1.msra.mxu0 0.0
    %1178 = vmatprep.subr.mxu0 0.0
    %1179 = vmatpush1.msra.mxu0 0.0
    %1180 = vmatprep.subr.mxu0 0.0
    %1181 = vmatpush1.msra.mxu0 0.0
    %1182 = vmatprep.subr.mxu0 0.0
    %1183 = vmatpush1.msra.mxu0 0.0
    %1184 = vmatprep.subr.mxu0 0.0
    %1185 = vmatpush1.msra.mxu0 0.0
    %1186 = vmatprep.subr.mxu0 0.0
    %1187 = vmatpush1.msra.mxu0 0.0
    %1188 = vmatprep.subr.mxu0 0.0
    %1189 = vmatpush1.msra.mxu0 0.0
    %1190 = vmatprep.subr.mxu0 0.0
    %1191 = vmatpush1.msra.mxu0 0.0
    %1192 = vmatprep.mubr.f32.mxu0 0.0
    %1193 = vmatmul.mubr.f32.gmra.mrb[0].mxu0 %v1112
    %v1194 = vpop.f32.mrb[0].mxu0
    %v1195 = vadd.f32 0.0, %v1194
    %v1196 = vpop.f32.mrb[0].mxu0
    %1197 = vmatprep.mubr.f32.mxu0 0.0
    %1198 = vmatmul.mubr.f32.gmra.mrb[0].mxu0 %v1114
    %v1199 = vpop.f32.mrb[0].mxu0
    %v1200 = vadd.f32 0.0, %v1199
    %v1201 = vpop.f32.mrb[0].mxu0
    %1202 = vmatprep.mubr.f32.mxu0 0.0
    %1203 = vmatmul.mubr.f32.gmra.mrb[0].mxu0 %v1116
    %v1204 = vpop.f32.mrb[0].mxu0
    %v1205 = vadd.f32 0.0, %v1204
    %v1206 = vpop.f32.mrb[0].mxu0
    %1207 = vmatprep.mubr.f32.mxu0 0.0
    %1208 = vmatmul.mubr.f32.gmra.mrb[0].mxu0 %v1118
    %v1209 = vpop.f32.mrb[0].mxu0
    %v1210 = vadd.f32 0.0, %v1209
    %v1211 = vpop.f32.mrb[0].mxu0
    %1212 = vmatprep.mubr.f32.mxu0 0.0
    %1213 = vmatmul.mubr.f32.gmra.mrb[0].mxu0 %v1120
    %v1214 = vpop.f32.mrb[0].mxu0
    %v1215 = vadd.f32 0.0, %v1214
    %v1216 = vpop.f32.mrb[0].mxu0
    %1217 = vmatprep.mubr.f32.mxu0 0.0
    %1218 = vmatmul.mubr.f32.gmra.mrb[0].mxu0 %v1122
    %v1219 = vpop.f32.mrb[0].mxu0
    %v1220 = vadd.f32 0.0, %v1219
    %v1221 = vpop.f32.mrb[0].mxu0
    %1222 = vmatprep.mubr.f32.mxu0 0.0
    %1223 = vmatmul.mubr.f32.gmra.mrb[0].mxu0 %v1124
    %v1224 = vpop.f32.mrb[0].mxu0
    %v1225 = vadd.f32 0.0, %v1224
    %v1226 = vpop.f32.mrb[0].mxu0
    %1227 = vmatprep.mubr.f32.mxu0 0.0
    %1228 = vmatmul.mubr.f32.gmra.mrb[0].mxu0 %v1126
    %v1229 = vpop.f32.mrb[0].mxu0
    %v1230 = vadd.f32 0.0, %v1229
    %v1231 = vpop.f32.mrb[0].mxu0
    %1232 = vdwg.mxu0
    %v1234 = vsel %vm681, %v1074, 0
    %v1237 = vsel %vm681, %v1079, 0
    %v1240 = vsel %vm681, %v1084, 0
    %v1243 = vsel %vm681, %v1089, 0
    %v1246 = vsel %vm681, %v1094, 0
    %v1249 = vsel %vm681, %v1099, 0
    %v1252 = vsel %vm681, %v1104, 0
    %v1255 = vsel %vm681, %v1109, 0
    %1257 = vmatprep.subr.mxu0 0.0
    %1258 = vmatpush1.msra.mxu0 %v996
    %1259 = vmatprep.subr.mxu0 0.0
    %1260 = vmatpush1.msra.mxu0 %v997
    %1261 = vmatprep.subr.mxu0 0.0
    %1262 = vmatpush1.msra.mxu0 %v998
    %1263 = vmatprep.subr.mxu0 0.0
    %1264 = vmatpush1.msra.mxu0 %v999
    %1265 = vmatprep.subr.mxu0 0.0
    %1266 = vmatpush1.msra.mxu0 0.0
    %1267 = vmatprep.subr.mxu0 0.0
    %1268 = vmatpush1.msra.mxu0 0.0
    %1269 = vmatprep.subr.mxu0 0.0
    %1270 = vmatpush1.msra.mxu0 0.0
    %1271 = vmatprep.subr.mxu0 0.0
    %1272 = vmatpush1.msra.mxu0 0.0
    %1273 = vmatprep.subr.mxu0 0.0
    %1274 = vmatpush1.msra.mxu0 0.0
    %1275 = vmatprep.subr.mxu0 0.0
    %1276 = vmatpush1.msra.mxu0 0.0
    %1277 = vmatprep.subr.mxu0 0.0
    %1278 = vmatpush1.msra.mxu0 0.0
    %1279 = vmatprep.subr.mxu0 0.0
    %1280 = vmatpush1.msra.mxu0 0.0
    %1281 = vmatprep.subr.mxu0 0.0
    %1282 = vmatpush1.msra.mxu0 0.0
    %1283 = vmatprep.subr.mxu0 0.0
    %1284 = vmatpush1.msra.mxu0 0.0
    %1285 = vmatprep.subr.mxu0 0.0
    %1286 = vmatpush1.msra.mxu0 0.0
    %1287 = vmatprep.subr.mxu0 0.0
    %1288 = vmatpush1.msra.mxu0 0.0
    %1289 = vmatprep.subr.mxu0 0.0
    %1290 = vmatpush1.msra.mxu0 0.0
    %1291 = vmatprep.subr.mxu0 0.0
    %1292 = vmatpush1.msra.mxu0 0.0
    %1293 = vmatprep.subr.mxu0 0.0
    %1294 = vmatpush1.msra.mxu0 0.0
    %1295 = vmatprep.subr.mxu0 0.0
    %1296 = vmatpush1.msra.mxu0 0.0
    %1297 = vmatprep.subr.mxu0 0.0
    %1298 = vmatpush1.msra.mxu0 0.0
    %1299 = vmatprep.subr.mxu0 0.0
    %1300 = vmatpush1.msra.mxu0 0.0
    %1301 = vmatprep.subr.mxu0 0.0
    %1302 = vmatpush1.msra.mxu0 0.0
    %1303 = vmatprep.subr.mxu0 0.0
    %1304 = vmatpush1.msra.mxu0 0.0
    %1305 = vmatprep.subr.mxu0 0.0
    %1306 = vmatpush1.msra.mxu0 0.0
    %1307 = vmatprep.subr.mxu0 0.0
    %1308 = vmatpush1.msra.mxu0 0.0
    %1309 = vmatprep.subr.mxu0 0.0
    %1310 = vmatpush1.msra.mxu0 0.0
    %1311 = vmatprep.subr.mxu0 0.0
    %1312 = vmatpush1.msra.mxu0 0.0
    %1313 = vmatprep.subr.mxu0 0.0
    %1314 = vmatpush1.msra.mxu0 0.0
    %1315 = vmatprep.subr.mxu0 0.0
    %1316 = vmatpush1.msra.mxu0 0.0
    %1317 = vmatprep.subr.mxu0 0.0
    %1318 = vmatpush1.msra.mxu0 0.0
    %1319 = vmatprep.subr.mxu0 0.0
    %1320 = vmatpush1.msra.mxu0 0.0
    %1321 = vmatprep.mubr.f32.mxu0 0.0
    %1322 = vmatmul.mubr.f32.gmra.mrb[0].mxu0 %v1234
    %v1323 = vpop.f32.mrb[0].mxu0
    %v1324 = vadd.f32 %v1195, %v1323
    %v1325 = vpop.f32.mrb[0].mxu0
    %1326 = vmatprep.mubr.f32.mxu0 0.0
    %1327 = vmatmul.mubr.f32.gmra.mrb[0].mxu0 %v1237
    %v1328 = vpop.f32.mrb[0].mxu0
    %v1329 = vadd.f32 %v1200, %v1328
    %v1330 = vpop.f32.mrb[0].mxu0
    %1331 = vmatprep.mubr.f32.mxu0 0.0
    %1332 = vmatmul.mubr.f32.gmra.mrb[0].mxu0 %v1240
    %v1333 = vpop.f32.mrb[0].mxu0
    %v1334 = vadd.f32 %v1205, %v1333
    %v1335 = vpop.f32.mrb[0].mxu0
    %1336 = vmatprep.mubr.f32.mxu0 0.0
    %1337 = vmatmul.mubr.f32.gmra.mrb[0].mxu0 %v1243
    %v1338 = vpop.f32.mrb[0].mxu0
    %v1339 = vadd.f32 %v1210, %v1338
    %v1340 = vpop.f32.mrb[0].mxu0
    %1341 = vmatprep.mubr.f32.mxu0 0.0
    %1342 = vmatmul.mubr.f32.gmra.mrb[0].mxu0 %v1246
    %v1343 = vpop.f32.mrb[0].mxu0
    %v1344 = vadd.f32 %v1215, %v1343
    %v1345 = vpop.f32.mrb[0].mxu0
    %1346 = vmatprep.mubr.f32.mxu0 0.0
    %1347 = vmatmul.mubr.f32.gmra.mrb[0].mxu0 %v1249
    %v1348 = vpop.f32.mrb[0].mxu0
    %v1349 = vadd.f32 %v1220, %v1348
    %v1350 = vpop.f32.mrb[0].mxu0
    %1351 = vmatprep.mubr.f32.mxu0 0.0
    %1352 = vmatmul.mubr.f32.gmra.mrb[0].mxu0 %v1252
    %v1353 = vpop.f32.mrb[0].mxu0
    %v1354 = vadd.f32 %v1225, %v1353
    %v1355 = vpop.f32.mrb[0].mxu0
    %1356 = vmatprep.mubr.f32.mxu0 0.0
    %1357 = vmatmul.mubr.f32.gmra.mrb[0].mxu0 %v1255
    %v1358 = vpop.f32.mrb[0].mxu0
    %v1359 = vadd.f32 %v1230, %v1358
    %v1360 = vpop.f32.mrb[0].mxu0
    %1361 = vdwg.mxu0
    %v1363 = vlaneseq
    %v1364 = vshrl.u32 %v1363, 7
    %v1365 = vsub.s32 0, %v1364
    %v1366 = vrot.slane %v1006, %v1365
    %v1368 = vadd.f32 %v1324, %v1366
    %v1369 = vadd.f32 %v1329, %v1366
    %v1370 = vadd.f32 %v1334, %v1366
    %v1371 = vadd.f32 %v1339, %v1366
    %v1372 = vadd.f32 %v1344, %v1366
    %v1373 = vadd.f32 %v1349, %v1366
    %v1374 = vadd.f32 %v1354, %v1366
    %v1375 = vadd.f32 %v1359, %v1366
    %v1376 = vmax.f32 %v1368, 0.0
    %v1377 = vmax.f32 %v1369, 0.0
    %v1378 = vmax.f32 %v1370, 0.0
    %v1379 = vmax.f32 %v1371, 0.0
    %v1380 = vmax.f32 %v1372, 0.0
    %v1381 = vmax.f32 %v1373, 0.0
    %v1382 = vmax.f32 %v1374, 0.0
    %v1383 = vmax.f32 %v1375, 0.0
    %1384 = vst.msk [vmem:[#allocation7] sm:$0xff] %vm681, %v1376
    %1385 = vst.msk [vmem:[#allocation7 + $0x8] sm:$0xff] %vm681, %v1377
    %1386 = vst.msk [vmem:[#allocation7 + $0x10] sm:$0xff] %vm681, %v1378
    %1387 = vst.msk [vmem:[#allocation7 + $0x18] sm:$0xff] %vm681, %v1379
    %1388 = vst.msk [vmem:[#allocation7 + $0x20] sm:$0xff] %vm681, %v1380
    %1389 = vst.msk [vmem:[#allocation7 + $0x28] sm:$0xff] %vm681, %v1381
    %1390 = vst.msk [vmem:[#allocation7 + $0x30] sm:$0xff] %vm681, %v1382
    %1391 = vst.msk [vmem:[#allocation7 + $0x38] sm:$0xff] %vm681, %v1383
    // Predicated region
    $region30: #{tpu_custom_call.1} parent=1 // pred_check
      _
    $region31: #{tpu_custom_call.1} parent=1 // pred_check_branch
      %1393 = sbr.rel (0) target = $region33
    $region32: #{tpu_custom_call.1} parent=1 // pred_region
      %s1395 = ssub.s32 1024, 1024
      %1396 = vsyncadd [#allocation4], %s1395
      %s1397 = sshll.u32 [#allocation7], 4
      %s1398 = int_to_ptr.vmem [resolvable:$true] %s1397
      %1403 = dma.vmem_to_hbm [thread:$0]  %s1398, 1024, %s5, [#allocation4], 128, 128, 8
    $region33: #{tpu_custom_call.1} parent=1 // pred_fallthru
      _
    // Predicated region
    $region34: #{tpu_custom_call.1} parent=1 // pred_check
      _
    $region35: #{tpu_custom_call.1} parent=1 // pred_check_branch
      %1405 = sbr.rel (0) target = $region37
    $region36: #{tpu_custom_call.1} parent=1 // pred_region
      %1406 = dma.done [#allocation4], 1024
    $region37: #{tpu_custom_call.1} parent=1 // pred_fallthru
      _
    %1407 = vsyncpa [#allocation3], 1
    %1408 = vsyncpa [#allocation6], 1
    %1409 = vsyncpa [#allocation4], 1

</llo_original>
